<compile_context>
chip_gen: v6e
topology: v6e:2x2x1
jax: 0.10.0
libtpu: 0.0.40
codegen_flags: <defaults>
</compile_context>

<pallas_src>
import functools

import jax
import jax.numpy as jnp
from jax.experimental import pallas as pl
from jax.experimental.pallas import tpu as pltpu

_LN_EPS = 1e-5                    # torch.nn.LayerNorm default eps
_MM_DTYPE = jnp.bfloat16          # matmul operand dtype (accumulate in f32 on MXU)
_LANE = 128                       # lane (last-dim) padding quantum
_SUB = 8                          # sublane (row-dim) padding quantum


def _rup(v, m):
    return ((v + m - 1) // m) * m


# ------------------------------- BlockSpec helpers ---------------------------------
def _const_spec(shape):
    # whole array, same block every grid step -> fetched once, stays resident in VMEM
    zero = (0,) * len(shape)
    return pl.BlockSpec(tuple(shape), lambda d, _z=zero: _z)


def _depth_spec(shape):
    # per-block tensor: leading depth axis selected (and squeezed) by the grid index
    zero = (0,) * len(shape)
    return pl.BlockSpec((None,) + tuple(shape), lambda d, _z=zero: (d,) + _z)


# ------------------------------ in-kernel math helpers ------------------------------
_GELU_C = 0.7978845608028654      # sqrt(2/pi)


def _gelu(x):
    # tanh-approximated GELU (== torch.nn.GELU(approximate='tanh')); tanh lowers to
    # the EUP slot.  ~1e-3 deviation vs exact erf GELU, inside bf16 matmul noise.
    return 0.5 * x * (1.0 + jnp.tanh(_GELU_C * (x + 0.044715 * x * x * x)))


def _layernorm(x, gamma, beta, inv_d):
    # Fused one-pass LayerNorm over the zero-padded feature axis.  The padded lanes
    # of x are exactly 0 (guaranteed at pack time), so sum(x)/dim and sum(x*x)/dim
    # are the true moments (divisor = real dim, matching PyTorch's biased variance);
    # gamma/beta are zero-padded, so the output's padded lanes are 0 with no mask.
    mu = jnp.sum(x, axis=-1, keepdims=True) * inv_d
    ex2 = jnp.sum(x * x, axis=-1, keepdims=True) * inv_d
    var = ex2 - mu * mu
    return (x - mu) * (jax.lax.rsqrt(var + _LN_EPS) * gamma) + beta


# ------------------------------------ the kernel ------------------------------------
def _mlp_mixer_kernel(patches_ref, wp_ref, bp_ref,
                      wt1_ref, wt2_ref, wc1_ref, wc2_ref, small_ref,
                      gh_ref, beh_ref, wh_ref, bh_ref, pool_ref,
                      out_ref, x_ref, *, inv_dim, nbatch):
    """One grid step per mixer block; step 0 also embeds patches, last step runs head."""
    d = pl.program_id(0)

    # ------- phase 1 (d == 0): patch embedding, kept resident in VMEM scratch -------
    @pl.when(d == 0)
    def _():
        x_ref[...] = (jnp.dot(patches_ref[...], wp_ref[...],
                              preferred_element_type=jnp.float32) + bp_ref[...])

    x = x_ref[...]                               # (B*NP, DP) f32, padded lanes == 0
    rows, dp = x.shape
    b = nbatch
    npad = rows // b                             # NP (padded token count per sample)
    tp = wt1_ref.shape[0]                        # TP
    cp = wc1_ref.shape[1]                        # CP

    # packed per-block small tensors (single DMA per step); all slices are static.
    small = small_ref[...]                       # (8 + TP + NP, W) f32
    g1, be1 = small[0:1, :dp], small[1:2, :dp]
    g2, be2 = small[2:3, :dp], small[3:4, :dp]
    bc1 = small[4:5, :cp]
    bc2 = small[5:6, :dp]
    bt1 = small[8:8 + tp, :dp]                   # (TP, DP) bias, pre-broadcast
    bt2 = small[8 + tp:8 + tp + npad, :dp]       # (NP, DP) bias, pre-broadcast

    # ----------------------- phase 2 (every d): mixer block d -----------------------
    # token mixing: contraction over the token axis as one batched matmul per Linear
    # (PyTorch (out,in) weight orientation -> no transposes anywhere).
    y3 = _layernorm(x, g1, be1, inv_dim).astype(_MM_DTYPE).reshape(b, npad, dp)
    wt1b = jnp.broadcast_to(wt1_ref[...], (b, tp, npad))
    h = jnp.einsum('btn,bnd->btd', wt1b, y3,
                   preferred_element_type=jnp.float32)            # (B, TP, DP)
    h = _gelu(h + bt1).astype(_MM_DTYPE)
    wt2b = jnp.broadcast_to(wt2_ref[...], (b, npad, tp))
    z = jnp.einsum('bnt,btd->bnd', wt2b, h,
                   preferred_element_type=jnp.float32)            # (B, NP, DP)
    x = x + (z + bt2).reshape(rows, dp)

    # channel mixing (row-wise over all B*NP token rows at once)
    y = _layernorm(x, g2, be2, inv_dim).astype(_MM_DTYPE)
    hc = _gelu(jnp.dot(y, wc1_ref[...], preferred_element_type=jnp.float32)
               + bc1).astype(_MM_DTYPE)
    x = x + (jnp.dot(hc, wc2_ref[...], preferred_element_type=jnp.float32) + bc2)
    x_ref[...] = x

    # -------- phase 3 (d == depth-1): LayerNorm -> token mean -> classifier --------
    @pl.when(d == pl.num_programs(0) - 1)
    def _():
        yh = _layernorm(x, gh_ref[...], beh_ref[...], inv_dim)    # (B*NP, DP) f32
        y3h = yh.reshape(b, npad, dp)
        # pool vector has 1/n on real tokens, 0 on padded tokens: per-sample token
        # mean + padded-token masking in one tiny batched matmul.
        pv = jnp.broadcast_to(pool_ref[...], (b, 1, npad))
        pooled = jnp.einsum('bon,bnd->bod', pv, y3h,
                            preferred_element_type=jnp.float32).reshape(b, dp)
        out_ref[...] = (jnp.dot(pooled.astype(_MM_DTYPE), wh_ref[...],
                                preferred_element_type=jnp.float32) + bh_ref[...])


# --------------------------------- parameters ---------------------------------------
def init_params(key, *, in_channels, dim, num_classes, patch_size, image_size,
                depth, token_dim, channel_dim):
    """Parameters in PyTorch layout/orientation (LayerNorm init: gamma=1, beta=0)."""
    n = (image_size // patch_size) ** 2
    keys = iter(jax.random.split(key, 8 * depth + 4))

    def w(shape, scale=0.02):
        return (scale * jax.random.normal(next(keys), shape)).astype(jnp.float32)

    params = {
        "conv_w": w((dim, in_channels, patch_size, patch_size)),  # Conv2d weight
        "conv_b": w((dim,)),
        "blocks": [],
        "ln_h_g": jnp.ones((dim,), jnp.float32),
        "ln_h_b": jnp.zeros((dim,), jnp.float32),
        "head_w": w((num_classes, dim)),                          # Linear weight
        "head_b": w((num_classes,)),
    }
    for _ in range(depth):
        params["blocks"].append({
            "ln1_g": jnp.ones((dim,), jnp.float32),
            "ln1_b": jnp.zeros((dim,), jnp.float32),
            "tok_w1": w((token_dim, n)),      # Linear(N, token_dim) weight
            "tok_b1": w((token_dim,)),
            "tok_w2": w((n, token_dim)),      # Linear(token_dim, N) weight
            "tok_b2": w((n,)),
            "ln2_g": jnp.ones((dim,), jnp.float32),
            "ln2_b": jnp.zeros((dim,), jnp.float32),
            "ch_w1": w((channel_dim, dim)),   # Linear(dim, channel_dim) weight
            "ch_b1": w((channel_dim,)),
            "ch_w2": w((dim, channel_dim)),   # Linear(channel_dim, dim) weight
            "ch_b2": w((dim,)),
        })
    return params


def pack_params(params, *, in_channels, dim, num_classes, patch_size, image_size,
                depth, token_dim, channel_dim):
    """Lane dims padded to x128, row dims padded to x8 only; per-block tensors stacked
    over a leading depth axis; matmul weights cast to bf16 (biases / LN params f32)."""
    n = (image_size // patch_size) ** 2
    p = in_channels * patch_size * patch_size
    NP, TP = _rup(n, _SUB), _rup(token_dim, _SUB)
    DP, CP, PP, NCP = (_rup(v, _LANE) for v in (dim, channel_dim, p, num_classes))
    W = max(DP, CP)

    def pad2(a, rows, cols, dtype):
        a = jnp.asarray(a, jnp.float32)
        a = jnp.pad(a, ((0, rows - a.shape[0]), (0, cols - a.shape[1])))
        return a.astype(dtype)

    def row(v, cols=W):
        return pad2(jnp.asarray(v, jnp.float32).reshape(1, -1), 1, cols, jnp.float32)

    def stack(xs):
        return jnp.stack(list(xs), axis=0)

    def small_slab(blk):
        # rows 0..5: ln1_g, ln1_b, ln2_g, ln2_b, ch_b1, ch_b2
        # rows 8..8+TP-1 / 8+TP..8+TP+NP-1: token biases pre-broadcast over the REAL
        # `dim` lanes only (padded lanes 0) so the resident x never picks up junk in
        # padded lanes -> enables the unmasked fused LayerNorm.
        parts = [row(blk["ln1_g"]), row(blk["ln1_b"]),
                 row(blk["ln2_g"]), row(blk["ln2_b"]),
                 row(blk["ch_b1"]), row(blk["ch_b2"]),
                 jnp.zeros((2, W), jnp.float32),
                 pad2(jnp.broadcast_to(
                     jnp.asarray(blk["tok_b1"], jnp.float32)[:, None],
                     (token_dim, dim)), TP, W, jnp.float32),
                 pad2(jnp.broadcast_to(
                     jnp.asarray(blk["tok_b2"], jnp.float32)[:, None],
                     (n, dim)), NP, W, jnp.float32)]
        return jnp.concatenate(parts, axis=0)          # (8 + TP + NP, W)

    blk = params["blocks"]
    return {
        # patch embedding: Conv2d(k=s=ps) weight flattened over (C, ph, pw) -> (P, D)
        "wp": pad2(params["conv_w"].reshape(dim, p).T, PP, DP, _MM_DTYPE),
        "bp": row(params["conv_b"], DP),
        # per-block tensors (stacked over depth); token-MLP weights stay in PyTorch
        # (out, in) orientation so both token matmuls are plain contractions.
        "wt1": stack(pad2(b["tok_w1"], TP, NP, _MM_DTYPE) for b in blk),
        "wt2": stack(pad2(b["tok_w2"], NP, TP, _MM_DTYPE) for b in blk),
        "wc1": stack(pad2(b["ch_w1"].T, DP, CP, _MM_DTYPE) for b in blk),
        "wc2": stack(pad2(b["ch_w2"].T, CP, DP, _MM_DTYPE) for b in blk),
        "small": stack(small_slab(b) for b in blk),
        # head
        "gh": row(params["ln_h_g"], DP),
        "beh": row(params["ln_h_b"], DP),
        "wh": pad2(params["head_w"].T, DP, NCP, _MM_DTYPE),
        "bh": row(params["head_b"], NCP),
        # per-sample token mean folded into one (1, NP) vector (masks padded tokens)
        "pool": ((jnp.arange(NP) < n).astype(jnp.float32) / n).reshape(1, NP),
    }


# ----------------------------------- forward ----------------------------------------
def mlp_mixer_forward(packed, x, *, in_channels, dim, num_classes, patch_size,
                      image_size, depth, token_dim, channel_dim):
    b, c, hh, ww = x.shape
    assert c == in_channels and hh == image_size and ww == image_size
    gh_, gw_ = hh // patch_size, ww // patch_size
    n = gh_ * gw_
    p = c * patch_size * patch_size
    NP, TP = _rup(n, _SUB), _rup(token_dim, _SUB)
    DP, CP, PP, NCP = (_rup(v, _LANE) for v in (dim, channel_dim, p, num_classes))
    W = max(DP, CP)
    SR = 8 + TP + NP

    # glue: Conv2d(k=s=ps) == matmul over flattened (C, ph, pw) patches (tiny here).
    # TODO(synk): for large images fold this rearrange into the kernel's DMA via a
    # (b, gh, gw) grid + Element-indexed BlockSpec instead of an HBM temporary.
    patches = x.reshape(b, c, gh_, patch_size, gw_, patch_size)
    patches = patches.transpose(0, 2, 4, 1, 3, 5).reshape(b, n, p)
    patches = jnp.pad(patches, ((0, 0), (0, NP - n), (0, PP - p)))
    patches = patches.reshape(b * NP, PP).astype(_MM_DTYPE)

    kernel = functools.partial(_mlp_mixer_kernel, inv_dim=1.0 / dim, nbatch=b)

    out = pl.pallas_call(
        kernel,
        out_shape=jax.ShapeDtypeStruct((b, NCP), jnp.float32),
        grid_spec=pltpu.PrefetchScalarGridSpec(
            num_scalar_prefetch=0,
            grid=(depth,),                       # one grid step per mixer block
            in_specs=[
                # constant-index inputs: fetched once, resident across all steps.
                # TODO(synk): at real sizes on v7x make these memory_space=pl.ANY and
                # DMA them under pl.when(d==0)/pl.when(d==last) instead.
                _const_spec((b * NP, PP)),       # patches
                _const_spec((PP, DP)),           # wp
                _const_spec((1, DP)),            # bp
                # depth-streamed (double-buffered) per-block tensors: 5 DMAs / step
                _depth_spec((TP, NP)),           # wt1  (token Linear #1, (out,in))
                _depth_spec((NP, TP)),           # wt2  (token Linear #2, (out,in))
                _depth_spec((DP, CP)),           # wc1  (channel Linear #1, (in,out))
                _depth_spec((CP, DP)),           # wc2  (channel Linear #2, (in,out))
                _depth_spec((SR, W)),            # packed LN params + biases
                # head (constant-index, used only at the last step)
                _const_spec((1, DP)),            # gh
                _const_spec((1, DP)),            # beh
                _const_spec((DP, NCP)),          # wh
                _const_spec((1, NCP)),           # bh
                _const_spec((1, NP)),            # pool vector (1/n on real tokens)
            ],
            out_specs=_const_spec((b, NCP)),
            scratch_shapes=[pltpu.VMEM((b * NP, DP), jnp.float32)],  # resident tokens
        ),
        # Depth steps carry state in scratch -> sequential ("arbitrary").
        # TODO(synk): at real sizes add a leading "parallel" batch axis (2 TCs on
        # v7x), split CP over a second grid axis, and set vmem_limit_bytes.
        compiler_params=pltpu.CompilerParams(dimension_semantics=("arbitrary",)),
    )(patches, packed["wp"], packed["bp"],
      packed["wt1"], packed["wt2"], packed["wc1"], packed["wc2"], packed["small"],
      packed["gh"], packed["beh"], packed["wh"], packed["bh"], packed["pool"])
    return out[:, :num_classes]


# ------------------------------------- main ------------------------------------------
if __name__ == "__main__":
    cfg = dict(in_channels=1, dim=32, num_classes=10, patch_size=4,
               image_size=16, depth=2, token_dim=16, channel_dim=64)
    key = jax.random.PRNGKey(0)
    pkey, xkey = jax.random.split(key)
    params = init_params(pkey, **cfg)
    packed = pack_params(params, **cfg)
    x = jax.random.normal(
        xkey, (2, cfg["in_channels"], cfg["image_size"], cfg["image_size"]),
        dtype=jnp.float32)

    fwd = jax.jit(functools.partial(mlp_mixer_forward, **cfg))
    out = fwd(packed, x)
    jax.block_until_ready(out)
    assert out.shape == (2, cfg["num_classes"]) and out.dtype == jnp.float32
    assert bool(jnp.all(jnp.isfinite(out)))
    print("KERNEL_OK")
</pallas_src>

<mosaic_0001>
module attributes {stable_mosaic.version = 11 : i64} {
  func.func @_mlp_mixer_kernel(%arg0: i32, %arg1: memref<32x128xbf16, #tpu.memory_space<vmem>>, %arg2: memref<128x128xbf16, #tpu.memory_space<vmem>>, %arg3: memref<1x128xf32, #tpu.memory_space<vmem>>, %arg4: memref<1x16x16xbf16, #tpu.memory_space<vmem>>, %arg5: memref<1x16x16xbf16, #tpu.memory_space<vmem>>, %arg6: memref<1x128x128xbf16, #tpu.memory_space<vmem>>, %arg7: memref<1x128x128xbf16, #tpu.memory_space<vmem>>, %arg8: memref<1x40x128xf32, #tpu.memory_space<vmem>>, %arg9: memref<1x128xf32, #tpu.memory_space<vmem>>, %arg10: memref<1x128xf32, #tpu.memory_space<vmem>>, %arg11: memref<128x128xbf16, #tpu.memory_space<vmem>>, %arg12: memref<1x128xf32, #tpu.memory_space<vmem>>, %arg13: memref<1x16xf32, #tpu.memory_space<vmem>>, %arg14: memref<2x128xf32, #tpu.memory_space<vmem>>, %arg15: memref<32x128xf32, #tpu.memory_space<vmem>>) attributes {dimension_semantics = [#tpu.dimension_semantics<arbitrary>], iteration_bounds = array<i64: 2>, scalar_prefetch = 0 : i64, scratch_operands = 1 : i64, tpu.core_type = #tpu.core_type<tc>, window_params = [{pipeline_mode = #tpu.pipeline_mode<synchronous>, transform_indices = @transform_0, window_bounds = array<i64: 32, 128>}, {pipeline_mode = #tpu.pipeline_mode<synchronous>, transform_indices = @transform_1, window_bounds = array<i64: 128, 128>}, {pipeline_mode = #tpu.pipeline_mode<synchronous>, transform_indices = @transform_2, window_bounds = array<i64: 1, 128>}, {transform_indices = @transform_3, window_bounds = array<i64: 1, 16, 16>}, {transform_indices = @transform_4, window_bounds = array<i64: 1, 16, 16>}, {transform_indices = @transform_5, window_bounds = array<i64: 1, 128, 128>}, {transform_indices = @transform_6, window_bounds = array<i64: 1, 128, 128>}, {transform_indices = @transform_7, window_bounds = array<i64: 1, 40, 128>}, {pipeline_mode = #tpu.pipeline_mode<synchronous>, transform_indices = @transform_8, window_bounds = array<i64: 1, 128>}, {pipeline_mode = #tpu.pipeline_mode<synchronous>, transform_indices = @transform_9, window_bounds = array<i64: 1, 128>}, {pipeline_mode = #tpu.pipeline_mode<synchronous>, transform_indices = @transform_10, window_bounds = array<i64: 128, 128>}, {pipeline_mode = #tpu.pipeline_mode<synchronous>, transform_indices = @transform_11, window_bounds = array<i64: 1, 128>}, {pipeline_mode = #tpu.pipeline_mode<synchronous>, transform_indices = @transform_12, window_bounds = array<i64: 1, 16>}, {pipeline_mode = #tpu.pipeline_mode<synchronous>, transform_indices = @transform_13, window_bounds = array<i64: 2, 128>}]} {
    %c0_i32 = arith.constant 0 : i32
    %0 = arith.cmpi eq, %arg0, %c0_i32 : i32
    %1 = arith.extui %0 : i1 to i32
    %c0_i32_0 = arith.constant 0 : i32
    %2 = arith.cmpi ne, %1, %c0_i32_0 : i32
    scf.if %2 {
      %c0_41 = arith.constant 0 : index
      %c0_42 = arith.constant 0 : index
      %122 = vector.load %arg1[%c0_41, %c0_42] : memref<32x128xbf16, #tpu.memory_space<vmem>>, vector<32x128xbf16>
      %c0_43 = arith.constant 0 : index
      %c0_44 = arith.constant 0 : index
      %123 = vector.load %arg2[%c0_43, %c0_44] : memref<128x128xbf16, #tpu.memory_space<vmem>>, vector<128x128xbf16>
      %cst_45 = arith.constant dense<0.000000e+00> : vector<32x128xf32>
      %124 = tpu.matmul %122, %123, %cst_45 {dimension_numbers = #tpu.dot_dimension_numbers<[1], [0], [0], [1], [0, 0, 1, 1], [], []>} : vector<32x128xbf16>, vector<128x128xbf16>, vector<32x128xf32> -> vector<32x128xf32>
      %c0_46 = arith.constant 0 : index
      %c0_47 = arith.constant 0 : index
      %125 = vector.load %arg3[%c0_46, %c0_47] : memref<1x128xf32, #tpu.memory_space<vmem>>, vector<1x128xf32>
      %126 = vector.broadcast %125 : vector<1x128xf32> to vector<32x128xf32>
      %127 = arith.addf %124, %126 : vector<32x128xf32>
      %c0_48 = arith.constant 0 : index
      %c0_49 = arith.constant 0 : index
      %128 = vector.load %arg15[%c0_48, %c0_49] : memref<32x128xf32, #tpu.memory_space<vmem>>, vector<32x128xf32>
      tpu.vector_store %arg15[%c0_48, %c0_49], %127 {strides = array<i32>} : memref<32x128xf32, #tpu.memory_space<vmem>>, vector<32x128xf32>,
    } else {
    }
    %c0 = arith.constant 0 : index
    %c0_1 = arith.constant 0 : index
    %3 = vector.load %arg15[%c0, %c0_1] : memref<32x128xf32, #tpu.memory_space<vmem>>, vector<32x128xf32>
    %c0_2 = arith.constant 0 : index
    %c0_3 = arith.constant 0 : index
    %c0_4 = arith.constant 0 : index
    %4 = vector.load %arg8[%c0_2, %c0_3, %c0_4] : memref<1x40x128xf32, #tpu.memory_space<vmem>>, vector<1x40x128xf32>
    %5 = vector.shape_cast %4 : vector<1x40x128xf32> to vector<40x128xf32>
    %6 = vector.extract_strided_slice %5 {offsets = [0, 0], sizes = [1, 128], strides = [1, 1]} : vector<40x128xf32> to vector<1x128xf32>
    %7 = vector.extract_strided_slice %5 {offsets = [1, 0], sizes = [1, 128], strides = [1, 1]} : vector<40x128xf32> to vector<1x128xf32>
    %8 = vector.extract_strided_slice %5 {offsets = [2, 0], sizes = [1, 128], strides = [1, 1]} : vector<40x128xf32> to vector<1x128xf32>
    %9 = vector.extract_strided_slice %5 {offsets = [3, 0], sizes = [1, 128], strides = [1, 1]} : vector<40x128xf32> to vector<1x128xf32>
    %10 = vector.extract_strided_slice %5 {offsets = [4, 0], sizes = [1, 128], strides = [1, 1]} : vector<40x128xf32> to vector<1x128xf32>
    %11 = vector.extract_strided_slice %5 {offsets = [5, 0], sizes = [1, 128], strides = [1, 1]} : vector<40x128xf32> to vector<1x128xf32>
    %12 = vector.extract_strided_slice %5 {offsets = [8, 0], sizes = [16, 128], strides = [1, 1]} : vector<40x128xf32> to vector<16x128xf32>
    %13 = vector.extract_strided_slice %5 {offsets = [24, 0], sizes = [16, 128], strides = [1, 1]} : vector<40x128xf32> to vector<16x128xf32>
    %cst = arith.constant dense<0.000000e+00> : vector<32xf32>
    %14 = vector.multi_reduction <add>, %3, %cst [1] : vector<32x128xf32> to vector<32xf32>
    %15 = vector.shape_cast %14 : vector<32xf32> to vector<32x1xf32>
    %cst_5 = arith.constant 3.125000e-02 : f32
    %16 = vector.broadcast %cst_5 : f32 to vector<32x1xf32>
    %17 = arith.mulf %15, %16 : vector<32x1xf32>
    %18 = arith.mulf %3, %3 : vector<32x128xf32>
    %cst_6 = arith.constant dense<0.000000e+00> : vector<32xf32>
    %19 = vector.multi_reduction <add>, %18, %cst_6 [1] : vector<32x128xf32> to vector<32xf32>
    %20 = vector.shape_cast %19 : vector<32xf32> to vector<32x1xf32>
    %cst_7 = arith.constant 3.125000e-02 : f32
    %21 = vector.broadcast %cst_7 : f32 to vector<32x1xf32>
    %22 = arith.mulf %20, %21 : vector<32x1xf32>
    %23 = arith.mulf %17, %17 : vector<32x1xf32>
    %24 = arith.subf %22, %23 : vector<32x1xf32>
    %25 = vector.broadcast %17 : vector<32x1xf32> to vector<32x128xf32>
    %26 = arith.subf %3, %25 : vector<32x128xf32>
    %cst_8 = arith.constant 9.99999974E-6 : f32
    %27 = vector.broadcast %cst_8 : f32 to vector<32x1xf32>
    %28 = arith.addf %24, %27 : vector<32x1xf32>
    %29 = math.rsqrt %28 : vector<32x1xf32>
    %30 = vector.broadcast %29 : vector<32x1xf32> to vector<32x128xf32>
    %31 = vector.broadcast %6 : vector<1x128xf32> to vector<32x128xf32>
    %32 = arith.mulf %30, %31 : vector<32x128xf32>
    %33 = arith.mulf %26, %32 : vector<32x128xf32>
    %34 = vector.broadcast %7 : vector<1x128xf32> to vector<32x128xf32>
    %35 = arith.addf %33, %34 : vector<32x128xf32>
    %36 = arith.truncf %35 : vector<32x128xf32> to vector<32x128xbf16>
    %37 = vector.shape_cast %36 : vector<32x128xbf16> to vector<2x16x128xbf16>
    %c0_9 = arith.constant 0 : index
    %c0_10 = arith.constant 0 : index
    %c0_11 = arith.constant 0 : index
    %38 = vector.load %arg4[%c0_9, %c0_10, %c0_11] : memref<1x16x16xbf16, #tpu.memory_space<vmem>>, vector<1x16x16xbf16>
    %39 = vector.shape_cast %38 : vector<1x16x16xbf16> to vector<16x16xbf16>
    %40 = vector.shape_cast %39 : vector<16x16xbf16> to vector<1x16x16xbf16>
    %41 = vector.broadcast %40 : vector<1x16x16xbf16> to vector<2x16x16xbf16>
    "tpu.trace_start"() <{level = 10 : i32, message = "btn,bnd->btd"}> : () -> ()
    %cst_12 = arith.constant dense<0.000000e+00> : vector<2x16x128xf32>
    %42 = tpu.matmul %41, %37, %cst_12 {dimension_numbers = #tpu.dot_dimension_numbers<[2], [1], [1], [2], [0, 0, 0, 1, 1, 2], [0], [0]>} : vector<2x16x16xbf16>, vector<2x16x128xbf16>, vector<2x16x128xf32> -> vector<2x16x128xf32>
    "tpu.trace_stop"() : () -> ()
    %43 = vector.shape_cast %12 : vector<16x128xf32> to vector<1x16x128xf32>
    %44 = vector.broadcast %43 : vector<1x16x128xf32> to vector<2x16x128xf32>
    %45 = arith.addf %42, %44 : vector<2x16x128xf32>
    %cst_13 = arith.constant 5.000000e-01 : f32
    %46 = vector.broadcast %cst_13 : f32 to vector<2x16x128xf32>
    %47 = arith.mulf %46, %45 : vector<2x16x128xf32>
    %cst_14 = arith.constant 4.471500e-02 : f32
    %48 = vector.broadcast %cst_14 : f32 to vector<2x16x128xf32>
    %49 = arith.mulf %48, %45 : vector<2x16x128xf32>
    %50 = arith.mulf %49, %45 : vector<2x16x128xf32>
    %51 = arith.mulf %50, %45 : vector<2x16x128xf32>
    %52 = arith.addf %45, %51 : vector<2x16x128xf32>
    %cst_15 = arith.constant 0.797884583 : f32
    %53 = vector.broadcast %cst_15 : f32 to vector<2x16x128xf32>
    %54 = arith.mulf %53, %52 : vector<2x16x128xf32>
    %55 = math.tanh %54 : vector<2x16x128xf32>
    %cst_16 = arith.constant 1.000000e+00 : f32
    %56 = vector.broadcast %cst_16 : f32 to vector<2x16x128xf32>
    %57 = arith.addf %56, %55 : vector<2x16x128xf32>
    %58 = arith.mulf %47, %57 : vector<2x16x128xf32>
    %59 = arith.truncf %58 : vector<2x16x128xf32> to vector<2x16x128xbf16>
    %c0_17 = arith.constant 0 : index
    %c0_18 = arith.constant 0 : index
    %c0_19 = arith.constant 0 : index
    %60 = vector.load %arg5[%c0_17, %c0_18, %c0_19] : memref<1x16x16xbf16, #tpu.memory_space<vmem>>, vector<1x16x16xbf16>
    %61 = vector.shape_cast %60 : vector<1x16x16xbf16> to vector<16x16xbf16>
    %62 = vector.shape_cast %61 : vector<16x16xbf16> to vector<1x16x16xbf16>
    %63 = vector.broadcast %62 : vector<1x16x16xbf16> to vector<2x16x16xbf16>
    "tpu.trace_start"() <{level = 10 : i32, message = "bnt,btd->bnd"}> : () -> ()
    %cst_20 = arith.constant dense<0.000000e+00> : vector<2x16x128xf32>
    %64 = tpu.matmul %63, %59, %cst_20 {dimension_numbers = #tpu.dot_dimension_numbers<[2], [1], [1], [2], [0, 0, 0, 1, 1, 2], [0], [0]>} : vector<2x16x16xbf16>, vector<2x16x128xbf16>, vector<2x16x128xf32> -> vector<2x16x128xf32>
    "tpu.trace_stop"() : () -> ()
    %65 = vector.shape_cast %13 : vector<16x128xf32> to vector<1x16x128xf32>
    %66 = vector.broadcast %65 : vector<1x16x128xf32> to vector<2x16x128xf32>
    %67 = arith.addf %64, %66 : vector<2x16x128xf32>
    %68 = vector.shape_cast %67 : vector<2x16x128xf32> to vector<32x128xf32>
    %69 = arith.addf %3, %68 : vector<32x128xf32>
    %cst_21 = arith.constant dense<0.000000e+00> : vector<32xf32>
    %70 = vector.multi_reduction <add>, %69, %cst_21 [1] : vector<32x128xf32> to vector<32xf32>
    %71 = vector.shape_cast %70 : vector<32xf32> to vector<32x1xf32>
    %cst_22 = arith.constant 3.125000e-02 : f32
    %72 = vector.broadcast %cst_22 : f32 to vector<32x1xf32>
    %73 = arith.mulf %71, %72 : vector<32x1xf32>
    %74 = arith.mulf %69, %69 : vector<32x128xf32>
    %cst_23 = arith.constant dense<0.000000e+00> : vector<32xf32>
    %75 = vector.multi_reduction <add>, %74, %cst_23 [1] : vector<32x128xf32> to vector<32xf32>
    %76 = vector.shape_cast %75 : vector<32xf32> to vector<32x1xf32>
    %cst_24 = arith.constant 3.125000e-02 : f32
    %77 = vector.broadcast %cst_24 : f32 to vector<32x1xf32>
    %78 = arith.mulf %76, %77 : vector<32x1xf32>
    %79 = arith.mulf %73, %73 : vector<32x1xf32>
    %80 = arith.subf %78, %79 : vector<32x1xf32>
    %81 = vector.broadcast %73 : vector<32x1xf32> to vector<32x128xf32>
    %82 = arith.subf %69, %81 : vector<32x128xf32>
    %cst_25 = arith.constant 9.99999974E-6 : f32
    %83 = vector.broadcast %cst_25 : f32 to vector<32x1xf32>
    %84 = arith.addf %80, %83 : vector<32x1xf32>
    %85 = math.rsqrt %84 : vector<32x1xf32>
    %86 = vector.broadcast %85 : vector<32x1xf32> to vector<32x128xf32>
    %87 = vector.broadcast %8 : vector<1x128xf32> to vector<32x128xf32>
    %88 = arith.mulf %86, %87 : vector<32x128xf32>
    %89 = arith.mulf %82, %88 : vector<32x128xf32>
    %90 = vector.broadcast %9 : vector<1x128xf32> to vector<32x128xf32>
    %91 = arith.addf %89, %90 : vector<32x128xf32>
    %92 = arith.truncf %91 : vector<32x128xf32> to vector<32x128xbf16>
    %c0_26 = arith.constant 0 : index
    %c0_27 = arith.constant 0 : index
    %c0_28 = arith.constant 0 : index
    %93 = vector.load %arg6[%c0_26, %c0_27, %c0_28] : memref<1x128x128xbf16, #tpu.memory_space<vmem>>, vector<1x128x128xbf16>
    %94 = vector.shape_cast %93 : vector<1x128x128xbf16> to vector<128x128xbf16>
    %cst_29 = arith.constant dense<0.000000e+00> : vector<32x128xf32>
    %95 = tpu.matmul %92, %94, %cst_29 {dimension_numbers = #tpu.dot_dimension_numbers<[1], [0], [0], [1], [0, 0, 1, 1], [], []>} : vector<32x128xbf16>, vector<128x128xbf16>, vector<32x128xf32> -> vector<32x128xf32>
    %96 = vector.broadcast %10 : vector<1x128xf32> to vector<32x128xf32>
    %97 = arith.addf %95, %96 : vector<32x128xf32>
    %cst_30 = arith.constant 5.000000e-01 : f32
    %98 = vector.broadcast %cst_30 : f32 to vector<32x128xf32>
    %99 = arith.mulf %98, %97 : vector<32x128xf32>
    %cst_31 = arith.constant 4.471500e-02 : f32
    %100 = vector.broadcast %cst_31 : f32 to vector<32x128xf32>
    %101 = arith.mulf %100, %97 : vector<32x128xf32>
    %102 = arith.mulf %101, %97 : vector<32x128xf32>
    %103 = arith.mulf %102, %97 : vector<32x128xf32>
    %104 = arith.addf %97, %103 : vector<32x128xf32>
    %cst_32 = arith.constant 0.797884583 : f32
    %105 = vector.broadcast %cst_32 : f32 to vector<32x128xf32>
    %106 = arith.mulf %105, %104 : vector<32x128xf32>
    %107 = math.tanh %106 : vector<32x128xf32>
    %cst_33 = arith.constant 1.000000e+00 : f32
    %108 = vector.broadcast %cst_33 : f32 to vector<32x128xf32>
    %109 = arith.addf %108, %107 : vector<32x128xf32>
    %110 = arith.mulf %99, %109 : vector<32x128xf32>
    %111 = arith.truncf %110 : vector<32x128xf32> to vector<32x128xbf16>
    %c0_34 = arith.constant 0 : index
    %c0_35 = arith.constant 0 : index
    %c0_36 = arith.constant 0 : index
    %112 = vector.load %arg7[%c0_34, %c0_35, %c0_36] : memref<1x128x128xbf16, #tpu.memory_space<vmem>>, vector<1x128x128xbf16>
    %113 = vector.shape_cast %112 : vector<1x128x128xbf16> to vector<128x128xbf16>
    %cst_37 = arith.constant dense<0.000000e+00> : vector<32x128xf32>
    %114 = tpu.matmul %111, %113, %cst_37 {dimension_numbers = #tpu.dot_dimension_numbers<[1], [0], [0], [1], [0, 0, 1, 1], [], []>} : vector<32x128xbf16>, vector<128x128xbf16>, vector<32x128xf32> -> vector<32x128xf32>
    %115 = vector.broadcast %11 : vector<1x128xf32> to vector<32x128xf32>
    %116 = arith.addf %114, %115 : vector<32x128xf32>
    %117 = arith.addf %69, %116 : vector<32x128xf32>
    %c0_38 = arith.constant 0 : index
    %c0_39 = arith.constant 0 : index
    %118 = vector.load %arg15[%c0_38, %c0_39] : memref<32x128xf32, #tpu.memory_space<vmem>>, vector<32x128xf32>
    tpu.vector_store %arg15[%c0_38, %c0_39], %117 {strides = array<i32>} : memref<32x128xf32, #tpu.memory_space<vmem>>, vector<32x128xf32>,
    %c1_i32 = arith.constant 1 : i32
    %119 = arith.cmpi eq, %arg0, %c1_i32 : i32
    %120 = arith.extui %119 : i1 to i32
    %c0_i32_40 = arith.constant 0 : i32
    %121 = arith.cmpi ne, %120, %c0_i32_40 : i32
    scf.if %121 {
      %c0_41 = arith.constant 0 : index
      %c0_42 = arith.constant 0 : index
      %122 = vector.load %arg9[%c0_41, %c0_42] : memref<1x128xf32, #tpu.memory_space<vmem>>, vector<1x128xf32>
      %c0_43 = arith.constant 0 : index
      %c0_44 = arith.constant 0 : index
      %123 = vector.load %arg10[%c0_43, %c0_44] : memref<1x128xf32, #tpu.memory_space<vmem>>, vector<1x128xf32>
      %cst_45 = arith.constant dense<0.000000e+00> : vector<32xf32>
      %124 = vector.multi_reduction <add>, %117, %cst_45 [1] : vector<32x128xf32> to vector<32xf32>
      %125 = vector.shape_cast %124 : vector<32xf32> to vector<32x1xf32>
      %cst_46 = arith.constant 3.125000e-02 : f32
      %126 = vector.broadcast %cst_46 : f32 to vector<32x1xf32>
      %127 = arith.mulf %125, %126 : vector<32x1xf32>
      %128 = arith.mulf %117, %117 : vector<32x128xf32>
      %cst_47 = arith.constant dense<0.000000e+00> : vector<32xf32>
      %129 = vector.multi_reduction <add>, %128, %cst_47 [1] : vector<32x128xf32> to vector<32xf32>
      %130 = vector.shape_cast %129 : vector<32xf32> to vector<32x1xf32>
      %cst_48 = arith.constant 3.125000e-02 : f32
      %131 = vector.broadcast %cst_48 : f32 to vector<32x1xf32>
      %132 = arith.mulf %130, %131 : vector<32x1xf32>
      %133 = arith.mulf %127, %127 : vector<32x1xf32>
      %134 = arith.subf %132, %133 : vector<32x1xf32>
      %135 = vector.broadcast %127 : vector<32x1xf32> to vector<32x128xf32>
      %136 = arith.subf %117, %135 : vector<32x128xf32>
      %cst_49 = arith.constant 9.99999974E-6 : f32
      %137 = vector.broadcast %cst_49 : f32 to vector<32x1xf32>
      %138 = arith.addf %134, %137 : vector<32x1xf32>
      %139 = math.rsqrt %138 : vector<32x1xf32>
      %140 = vector.broadcast %139 : vector<32x1xf32> to vector<32x128xf32>
      %141 = vector.broadcast %122 : vector<1x128xf32> to vector<32x128xf32>
      %142 = arith.mulf %140, %141 : vector<32x128xf32>
      %143 = arith.mulf %136, %142 : vector<32x128xf32>
      %144 = vector.broadcast %123 : vector<1x128xf32> to vector<32x128xf32>
      %145 = arith.addf %143, %144 : vector<32x128xf32>
      %146 = vector.shape_cast %145 : vector<32x128xf32> to vector<2x16x128xf32>
      %c0_50 = arith.constant 0 : index
      %c0_51 = arith.constant 0 : index
      %147 = vector.load %arg13[%c0_50, %c0_51] : memref<1x16xf32, #tpu.memory_space<vmem>>, vector<1x16xf32>
      %148 = vector.shape_cast %147 : vector<1x16xf32> to vector<1x1x16xf32>
      %149 = vector.broadcast %148 : vector<1x1x16xf32> to vector<2x1x16xf32>
      "tpu.trace_start"() <{level = 10 : i32, message = "bon,bnd->bod"}> : () -> ()
      %cst_52 = arith.constant dense<0.000000e+00> : vector<2x1x128xf32>
      %150 = tpu.matmul %149, %146, %cst_52 {dimension_numbers = #tpu.dot_dimension_numbers<[2], [1], [1], [2], [0, 0, 0, 1, 1, 2], [0], [0]>} : vector<2x1x16xf32>, vector<2x16x128xf32>, vector<2x1x128xf32> -> vector<2x1x128xf32>
      "tpu.trace_stop"() : () -> ()
      %151 = vector.shape_cast %150 : vector<2x1x128xf32> to vector<2x128xf32>
      %152 = arith.truncf %151 : vector<2x128xf32> to vector<2x128xbf16>
      %c0_53 = arith.constant 0 : index
      %c0_54 = arith.constant 0 : index
      %153 = vector.load %arg11[%c0_53, %c0_54] : memref<128x128xbf16, #tpu.memory_space<vmem>>, vector<128x128xbf16>
      %cst_55 = arith.constant dense<0.000000e+00> : vector<2x128xf32>
      %154 = tpu.matmul %152, %153, %cst_55 {dimension_numbers = #tpu.dot_dimension_numbers<[1], [0], [0], [1], [0, 0, 1, 1], [], []>} : vector<2x128xbf16>, vector<128x128xbf16>, vector<2x128xf32> -> vector<2x128xf32>
      %c0_56 = arith.constant 0 : index
      %c0_57 = arith.constant 0 : index
      %155 = vector.load %arg12[%c0_56, %c0_57] : memref<1x128xf32, #tpu.memory_space<vmem>>, vector<1x128xf32>
      %156 = vector.broadcast %155 : vector<1x128xf32> to vector<2x128xf32>
      %157 = arith.addf %154, %156 : vector<2x128xf32>
      %c0_58 = arith.constant 0 : index
      %c0_59 = arith.constant 0 : index
      %158 = vector.load %arg14[%c0_58, %c0_59] : memref<2x128xf32, #tpu.memory_space<vmem>>, vector<2x128xf32>
      tpu.vector_store %arg14[%c0_58, %c0_59], %157 {strides = array<i32>} : memref<2x128xf32, #tpu.memory_space<vmem>>, vector<2x128xf32>,
    } else {
    }
    return
  }
  func.func @transform_0(%arg0: i32) -> (i32, i32) {
    %c0_i32 = arith.constant 0 : i32
    %c0_i32_0 = arith.constant 0 : i32
    %c0_i32_1 = arith.constant 0 : i32
    return %c0_i32, %c0_i32_0 : i32, i32
  }
  func.func @transform_1(%arg0: i32) -> (i32, i32) {
    %c0_i32 = arith.constant 0 : i32
    %c0_i32_0 = arith.constant 0 : i32
    %c0_i32_1 = arith.constant 0 : i32
    return %c0_i32, %c0_i32_0 : i32, i32
  }
  func.func @transform_2(%arg0: i32) -> (i32, i32) {
    %c0_i32 = arith.constant 0 : i32
    %c0_i32_0 = arith.constant 0 : i32
    %c0_i32_1 = arith.constant 0 : i32
    return %c0_i32, %c0_i32_0 : i32, i32
  }
  func.func @transform_3(%arg0: i32) -> (i32, i32, i32) {
    %c0_i32 = arith.constant 0 : i32
    %c0_i32_0 = arith.constant 0 : i32
    %c0_i32_1 = arith.constant 0 : i32
    return %arg0, %c0_i32, %c0_i32_0 : i32, i32, i32
  }
  func.func @transform_4(%arg0: i32) -> (i32, i32, i32) {
    %c0_i32 = arith.constant 0 : i32
    %c0_i32_0 = arith.constant 0 : i32
    %c0_i32_1 = arith.constant 0 : i32
    return %arg0, %c0_i32, %c0_i32_0 : i32, i32, i32
  }
  func.func @transform_5(%arg0: i32) -> (i32, i32, i32) {
    %c0_i32 = arith.constant 0 : i32
    %c0_i32_0 = arith.constant 0 : i32
    %c0_i32_1 = arith.constant 0 : i32
    return %arg0, %c0_i32, %c0_i32_0 : i32, i32, i32
  }
  func.func @transform_6(%arg0: i32) -> (i32, i32, i32) {
    %c0_i32 = arith.constant 0 : i32
    %c0_i32_0 = arith.constant 0 : i32
    %c0_i32_1 = arith.constant 0 : i32
    return %arg0, %c0_i32, %c0_i32_0 : i32, i32, i32
  }
  func.func @transform_7(%arg0: i32) -> (i32, i32, i32) {
    %c0_i32 = arith.constant 0 : i32
    %c0_i32_0 = arith.constant 0 : i32
    %c0_i32_1 = arith.constant 0 : i32
    return %arg0, %c0_i32, %c0_i32_0 : i32, i32, i32
  }
  func.func @transform_8(%arg0: i32) -> (i32, i32) {
    %c0_i32 = arith.constant 0 : i32
    %c0_i32_0 = arith.constant 0 : i32
    %c0_i32_1 = arith.constant 0 : i32
    return %c0_i32, %c0_i32_0 : i32, i32
  }
  func.func @transform_9(%arg0: i32) -> (i32, i32) {
    %c0_i32 = arith.constant 0 : i32
    %c0_i32_0 = arith.constant 0 : i32
    %c0_i32_1 = arith.constant 0 : i32
    return %c0_i32, %c0_i32_0 : i32, i32
  }
  func.func @transform_10(%arg0: i32) -> (i32, i32) {
    %c0_i32 = arith.constant 0 : i32
    %c0_i32_0 = arith.constant 0 : i32
    %c0_i32_1 = arith.constant 0 : i32
    return %c0_i32, %c0_i32_0 : i32, i32
  }
  func.func @transform_11(%arg0: i32) -> (i32, i32) {
    %c0_i32 = arith.constant 0 : i32
    %c0_i32_0 = arith.constant 0 : i32
    %c0_i32_1 = arith.constant 0 : i32
    return %c0_i32, %c0_i32_0 : i32, i32
  }
  func.func @transform_12(%arg0: i32) -> (i32, i32) {
    %c0_i32 = arith.constant 0 : i32
    %c0_i32_0 = arith.constant 0 : i32
    %c0_i32_1 = arith.constant 0 : i32
    return %c0_i32, %c0_i32_0 : i32, i32
  }
  func.func @transform_13(%arg0: i32) -> (i32, i32) {
    %c0_i32 = arith.constant 0 : i32
    %c0_i32_0 = arith.constant 0 : i32
    %c0_i32_1 = arith.constant 0 : i32
    return %c0_i32, %c0_i32_0 : i32, i32
  }
}

</mosaic_0001>

<llo_original>
// kernel: mlp_mixer_forward.1
$region0: #{mlp_mixer_forward.1}
  #allocation0 [shape = 'u32[]', space=smem, size = 0x4, offset = 0x4, fixed_abs, tag = 'smem constant byte address 0x4 - core index']
  #allocation1 [shape = 'u32[144,128]{1,0:T(1,128)}', space=vmem, size = 0x12000, scoped, tag = 'internal scratch']
  #allocation2 [shape = 'f32[32,128]{1,0:T(8,128)}', space=vmem, size = 0x4000, scoped, tag = 'scratch operand']
  %s0 = inlined_call_operand.vmem [shape: bf16[32,128], index: 0, kind: input, shape index: {}]
  %s1 = inlined_call_operand.hbm [shape: bf16[128,128], index: 1, kind: input, shape index: {}]
  %s2 = inlined_call_operand.vmem [shape: f32[1,128], index: 2, kind: input, shape index: {}]
  %s3 = inlined_call_operand.vmem [shape: bf16[2,16,16], index: 3, kind: input, shape index: {}]
  %s4 = inlined_call_operand.vmem [shape: bf16[2,16,16], index: 4, kind: input, shape index: {}]
  %s5 = inlined_call_operand.vmem [shape: bf16[2,128,128], index: 5, kind: input, shape index: {}]
  %s6 = inlined_call_operand.vmem [shape: bf16[2,128,128], index: 6, kind: input, shape index: {}]
  %s7 = inlined_call_operand.vmem [shape: f32[2,40,128], index: 7, kind: input, shape index: {}]
  %s8 = inlined_call_operand.vmem [shape: f32[1,128], index: 8, kind: input, shape index: {}]
  %s9 = inlined_call_operand.vmem [shape: f32[1,128], index: 9, kind: input, shape index: {}]
  %s10 = inlined_call_operand.hbm [shape: bf16[128,128], index: 10, kind: input, shape index: {}]
  %s11 = inlined_call_operand.vmem [shape: f32[1,128], index: 11, kind: input, shape index: {}]
  %s12 = inlined_call_operand.vmem [shape: f32[1,16], index: 12, kind: input, shape index: {}]
  %s13 = inlined_call_operand.hbm [shape: f32[2,128], index: 13, kind: output, shape index: {}]
  %s14 = sld [smem:[#allocation0]]
  $region101: #{mlp_mixer_forward.1} parent=0
    _
  %s16 = ssub.s32 1, %s14
  %s17 = scalar_select 0, %s16, %s14
  $region1: #{mlp_mixer_forward.1} parent=0
    #allocation3 [shape = 'u8[32768]{0}', space=vmem, size = 0x8000, scoped, tag = 'input window, operand 1, single buffered']
    #allocation4 [shape = 's32[2]{0}', space=sflag, size = 0x8, scoped, tag = 'scoped memory for mlp_mixer_forward.1']
    #allocation5 [shape = 's32[2]{0}', space=sflag, size = 0x8, scoped, tag = 'scoped memory for mlp_mixer_forward.1']
    #allocation6 [shape = 'u8[32768]{0}', space=vmem, size = 0x8000, scoped, tag = 'input window, operand 10, single buffered']
    #allocation7 [shape = 's32[1]{0}', space=sflag, size = 0x4, scoped, tag = 'scoped memory for mlp_mixer_forward.1']
    #allocation8 [shape = 'u8[1024]{0}', space=vmem, size = 0x400, scoped, tag = 'output window, operand 0, single buffered']
    %18 = vsyncpa [#allocation4], 0
    %19 = vsyncpa [#allocation7], 0
    %20 = vsyncpa [#allocation5], 0
    loop: start=0, step=1, limit=4
    $region2: #{mlp_mixer_forward.1} parent=1 // loop_pre_header
      _
    $region3: #{mlp_mixer_forward.1} parent=1 // loop_header
      %s22 = sphi 0, %s26
      %p23 = scmp.ge.s32.totalorder %s22, 4
      %s30 = sphi 0, %s30
      %s32 = sphi 0, %s30
      %s33 = sphi 0, %s32
      %s47 = sphi 0, %s33
      %s51 = sphi 0, %s51
      %s53 = sphi 0, %s51
      %s54 = sphi 0, %s53
      %s68 = sphi 0, %s54
      %s72 = sphi 0, %s72
      %s74 = sphi 0, %s72
      %s75 = sphi 0, %s74
      %s89 = sphi 0, %s75
      %s95 = sphi 0, %s97
      %s98 = sphi 0, %s95
      %s99 = sphi 0, %s98
      %s115 = sphi 0, %s99
      %s121 = sphi 0, %s123
      %s124 = sphi 0, %s121
      %s125 = sphi 0, %s124
      %s141 = sphi 0, %s125
      %s147 = sphi 0, %s149
      %s150 = sphi 0, %s147
      %s151 = sphi 0, %s150
      %s167 = sphi 0, %s151
      %s173 = sphi 0, %s175
      %s176 = sphi 0, %s173
      %s177 = sphi 0, %s176
      %s193 = sphi 0, %s177
      %s199 = sphi 0, %s201
      %s202 = sphi 0, %s199
      %s203 = sphi 0, %s202
      %s219 = sphi 0, %s203
      %s223 = sphi 0, %s223
      %s225 = sphi 0, %s223
      %s226 = sphi 0, %s225
      %s240 = sphi 0, %s226
      %s244 = sphi 0, %s244
      %s246 = sphi 0, %s244
      %s247 = sphi 0, %s246
      %s261 = sphi 0, %s247
      %s265 = sphi 0, %s265
      %s267 = sphi 0, %s265
      %s268 = sphi 0, %s267
      %s282 = sphi 0, %s268
      %s286 = sphi 0, %s286
      %s288 = sphi 0, %s286
      %s289 = sphi 0, %s288
      %s303 = sphi 0, %s289
      %s307 = sphi 0, %s307
      %s309 = sphi 0, %s307
      %s310 = sphi 0, %s309
      %s324 = sphi 0, %s310
      %s328 = sphi 0, %s328
      %s330 = sphi 0, %s328
      %s331 = sphi 0, %s330
      %s345 = sphi 0, %s331
    $region4: #{mlp_mixer_forward.1} parent=1 // loop_header_branch
      %25 = sbr.rel (%p23) target = $region8
    $region5: #{mlp_mixer_forward.1} parent=1 // loop_body
      %s27 = ssub.s32 %s22, 1
      %s28 = ssub.s32 %s22, 2
      %s29 = sadd.s32 %s22, 1
      %s31 = sadd.s32 %s30, 1
      %p34 = scmp.eq.s32.totalorder %s22, 1
      %p35 = scmp.ne.s32.totalorder %s30, %s32
      %p36 = scmp.eq.s32.totalorder %s22, 0
      %p37 = por %p35, %p36
      %p38 = scmp.ne.s32.totalorder %s30, %s32
      %p39 = scmp.eq.s32.totalorder %s27, 1
      %p40 = por %p38, %p39
      %p41 = scmp.ne.s32.totalorder %s32, %s33
      %p42 = scmp.eq.s32.totalorder %s27, 0
      %p43 = por %p41, %p42
      %p44 = scmp.ne.s32.totalorder %s32, %s33
      %p45 = scmp.eq.s32.totalorder %s28, 1
      %p46 = por %p44, %p45
      %p48 = scmp.ne.s32.totalorder %s33, %s47
      %p49 = scmp.eq.s32.totalorder %s28, 0
      %p50 = por %p48, %p49
      %s52 = sadd.s32 %s51, 1
      %p55 = scmp.eq.s32.totalorder %s22, 1
      %p56 = scmp.ne.s32.totalorder %s51, %s53
      %p57 = scmp.eq.s32.totalorder %s22, 0
      %p58 = por %p56, %p57
      %p59 = scmp.ne.s32.totalorder %s51, %s53
      %p60 = scmp.eq.s32.totalorder %s27, 1
      %p61 = por %p59, %p60
      %p62 = scmp.ne.s32.totalorder %s53, %s54
      %p63 = scmp.eq.s32.totalorder %s27, 0
      %p64 = por %p62, %p63
      %p65 = scmp.ne.s32.totalorder %s53, %s54
      %p66 = scmp.eq.s32.totalorder %s28, 1
      %p67 = por %p65, %p66
      %p69 = scmp.ne.s32.totalorder %s54, %s68
      %p70 = scmp.eq.s32.totalorder %s28, 0
      %p71 = por %p69, %p70
      %s73 = sadd.s32 %s72, 1
      %p76 = scmp.eq.s32.totalorder %s22, 1
      %p77 = scmp.ne.s32.totalorder %s72, %s74
      %p78 = scmp.eq.s32.totalorder %s22, 0
      %p79 = por %p77, %p78
      %p80 = scmp.ne.s32.totalorder %s72, %s74
      %p81 = scmp.eq.s32.totalorder %s27, 1
      %p82 = por %p80, %p81
      %p83 = scmp.ne.s32.totalorder %s74, %s75
      %p84 = scmp.eq.s32.totalorder %s27, 0
      %p85 = por %p83, %p84
      %p86 = scmp.ne.s32.totalorder %s74, %s75
      %p87 = scmp.eq.s32.totalorder %s28, 1
      %p88 = por %p86, %p87
      %p90 = scmp.ne.s32.totalorder %s75, %s89
      %p91 = scmp.eq.s32.totalorder %s28, 0
      %p92 = por %p90, %p91
      %s93 = ssub.s32 %s22, %s29
      %p94 = scmp.eq.s32.totalorder %s93, 0
      %s96 = sadd.s32 %s95, 1
      %s97 = scalar_select %p94, %s95, %s96
      %p100 = pneg %p94
      %p101 = scmp.eq.s32.totalorder %s22, 1
      %p102 = por %p100, %p101
      %p103 = scmp.ne.s32.totalorder %s95, %s98
      %p104 = scmp.eq.s32.totalorder %s22, 0
      %p105 = por %p103, %p104
      %p106 = scmp.ne.s32.totalorder %s95, %s98
      %p107 = scmp.eq.s32.totalorder %s27, 1
      %p108 = por %p106, %p107
      %p109 = scmp.ne.s32.totalorder %s98, %s99
      %p110 = scmp.eq.s32.totalorder %s27, 0
      %p111 = por %p109, %p110
      %p112 = scmp.ne.s32.totalorder %s98, %s99
      %p113 = scmp.eq.s32.totalorder %s28, 1
      %p114 = por %p112, %p113
      %p116 = scmp.ne.s32.totalorder %s99, %s115
      %p117 = scmp.eq.s32.totalorder %s28, 0
      %p118 = por %p116, %p117
      %s119 = ssub.s32 %s22, %s29
      %p120 = scmp.eq.s32.totalorder %s119, 0
      %s122 = sadd.s32 %s121, 1
      %s123 = scalar_select %p120, %s121, %s122
      %p126 = pneg %p120
      %p127 = scmp.eq.s32.totalorder %s22, 1
      %p128 = por %p126, %p127
      %p129 = scmp.ne.s32.totalorder %s121, %s124
      %p130 = scmp.eq.s32.totalorder %s22, 0
      %p131 = por %p129, %p130
      %p132 = scmp.ne.s32.totalorder %s121, %s124
      %p133 = scmp.eq.s32.totalorder %s27, 1
      %p134 = por %p132, %p133
      %p135 = scmp.ne.s32.totalorder %s124, %s125
      %p136 = scmp.eq.s32.totalorder %s27, 0
      %p137 = por %p135, %p136
      %p138 = scmp.ne.s32.totalorder %s124, %s125
      %p139 = scmp.eq.s32.totalorder %s28, 1
      %p140 = por %p138, %p139
      %p142 = scmp.ne.s32.totalorder %s125, %s141
      %p143 = scmp.eq.s32.totalorder %s28, 0
      %p144 = por %p142, %p143
      %s145 = ssub.s32 %s22, %s29
      %p146 = scmp.eq.s32.totalorder %s145, 0
      %s148 = sadd.s32 %s147, 1
      %s149 = scalar_select %p146, %s147, %s148
      %p152 = pneg %p146
      %p153 = scmp.eq.s32.totalorder %s22, 1
      %p154 = por %p152, %p153
      %p155 = scmp.ne.s32.totalorder %s147, %s150
      %p156 = scmp.eq.s32.totalorder %s22, 0
      %p157 = por %p155, %p156
      %p158 = scmp.ne.s32.totalorder %s147, %s150
      %p159 = scmp.eq.s32.totalorder %s27, 1
      %p160 = por %p158, %p159
      %p161 = scmp.ne.s32.totalorder %s150, %s151
      %p162 = scmp.eq.s32.totalorder %s27, 0
      %p163 = por %p161, %p162
      %p164 = scmp.ne.s32.totalorder %s150, %s151
      %p165 = scmp.eq.s32.totalorder %s28, 1
      %p166 = por %p164, %p165
      %p168 = scmp.ne.s32.totalorder %s151, %s167
      %p169 = scmp.eq.s32.totalorder %s28, 0
      %p170 = por %p168, %p169
      %s171 = ssub.s32 %s22, %s29
      %p172 = scmp.eq.s32.totalorder %s171, 0
      %s174 = sadd.s32 %s173, 1
      %s175 = scalar_select %p172, %s173, %s174
      %p178 = pneg %p172
      %p179 = scmp.eq.s32.totalorder %s22, 1
      %p180 = por %p178, %p179
      %p181 = scmp.ne.s32.totalorder %s173, %s176
      %p182 = scmp.eq.s32.totalorder %s22, 0
      %p183 = por %p181, %p182
      %p184 = scmp.ne.s32.totalorder %s173, %s176
      %p185 = scmp.eq.s32.totalorder %s27, 1
      %p186 = por %p184, %p185
      %p187 = scmp.ne.s32.totalorder %s176, %s177
      %p188 = scmp.eq.s32.totalorder %s27, 0
      %p189 = por %p187, %p188
      %p190 = scmp.ne.s32.totalorder %s176, %s177
      %p191 = scmp.eq.s32.totalorder %s28, 1
      %p192 = por %p190, %p191
      %p194 = scmp.ne.s32.totalorder %s177, %s193
      %p195 = scmp.eq.s32.totalorder %s28, 0
      %p196 = por %p194, %p195
      %s197 = ssub.s32 %s22, %s29
      %p198 = scmp.eq.s32.totalorder %s197, 0
      %s200 = sadd.s32 %s199, 1
      %s201 = scalar_select %p198, %s199, %s200
      %p204 = pneg %p198
      %p205 = scmp.eq.s32.totalorder %s22, 1
      %p206 = por %p204, %p205
      %p207 = scmp.ne.s32.totalorder %s199, %s202
      %p208 = scmp.eq.s32.totalorder %s22, 0
      %p209 = por %p207, %p208
      %p210 = scmp.ne.s32.totalorder %s199, %s202
      %p211 = scmp.eq.s32.totalorder %s27, 1
      %p212 = por %p210, %p211
      %p213 = scmp.ne.s32.totalorder %s202, %s203
      %p214 = scmp.eq.s32.totalorder %s27, 0
      %p215 = por %p213, %p214
      %p216 = scmp.ne.s32.totalorder %s202, %s203
      %p217 = scmp.eq.s32.totalorder %s28, 1
      %p218 = por %p216, %p217
      %p220 = scmp.ne.s32.totalorder %s203, %s219
      %p221 = scmp.eq.s32.totalorder %s28, 0
      %p222 = por %p220, %p221
      %s224 = sadd.s32 %s223, 1
      %p227 = scmp.eq.s32.totalorder %s22, 1
      %p228 = scmp.ne.s32.totalorder %s223, %s225
      %p229 = scmp.eq.s32.totalorder %s22, 0
      %p230 = por %p228, %p229
      %p231 = scmp.ne.s32.totalorder %s223, %s225
      %p232 = scmp.eq.s32.totalorder %s27, 1
      %p233 = por %p231, %p232
      %p234 = scmp.ne.s32.totalorder %s225, %s226
      %p235 = scmp.eq.s32.totalorder %s27, 0
      %p236 = por %p234, %p235
      %p237 = scmp.ne.s32.totalorder %s225, %s226
      %p238 = scmp.eq.s32.totalorder %s28, 1
      %p239 = por %p237, %p238
      %p241 = scmp.ne.s32.totalorder %s226, %s240
      %p242 = scmp.eq.s32.totalorder %s28, 0
      %p243 = por %p241, %p242
      %s245 = sadd.s32 %s244, 1
      %p248 = scmp.eq.s32.totalorder %s22, 1
      %p249 = scmp.ne.s32.totalorder %s244, %s246
      %p250 = scmp.eq.s32.totalorder %s22, 0
      %p251 = por %p249, %p250
      %p252 = scmp.ne.s32.totalorder %s244, %s246
      %p253 = scmp.eq.s32.totalorder %s27, 1
      %p254 = por %p252, %p253
      %p255 = scmp.ne.s32.totalorder %s246, %s247
      %p256 = scmp.eq.s32.totalorder %s27, 0
      %p257 = por %p255, %p256
      %p258 = scmp.ne.s32.totalorder %s246, %s247
      %p259 = scmp.eq.s32.totalorder %s28, 1
      %p260 = por %p258, %p259
      %p262 = scmp.ne.s32.totalorder %s247, %s261
      %p263 = scmp.eq.s32.totalorder %s28, 0
      %p264 = por %p262, %p263
      %s266 = sadd.s32 %s265, 1
      %p269 = scmp.eq.s32.totalorder %s22, 1
      %p270 = scmp.ne.s32.totalorder %s265, %s267
      %p271 = scmp.eq.s32.totalorder %s22, 0
      %p272 = por %p270, %p271
      %p273 = scmp.ne.s32.totalorder %s265, %s267
      %p274 = scmp.eq.s32.totalorder %s27, 1
      %p275 = por %p273, %p274
      %p276 = scmp.ne.s32.totalorder %s267, %s268
      %p277 = scmp.eq.s32.totalorder %s27, 0
      %p278 = por %p276, %p277
      %p279 = scmp.ne.s32.totalorder %s267, %s268
      %p280 = scmp.eq.s32.totalorder %s28, 1
      %p281 = por %p279, %p280
      %p283 = scmp.ne.s32.totalorder %s268, %s282
      %p284 = scmp.eq.s32.totalorder %s28, 0
      %p285 = por %p283, %p284
      %s287 = sadd.s32 %s286, 1
      %p290 = scmp.eq.s32.totalorder %s22, 1
      %p291 = scmp.ne.s32.totalorder %s286, %s288
      %p292 = scmp.eq.s32.totalorder %s22, 0
      %p293 = por %p291, %p292
      %p294 = scmp.ne.s32.totalorder %s286, %s288
      %p295 = scmp.eq.s32.totalorder %s27, 1
      %p296 = por %p294, %p295
      %p297 = scmp.ne.s32.totalorder %s288, %s289
      %p298 = scmp.eq.s32.totalorder %s27, 0
      %p299 = por %p297, %p298
      %p300 = scmp.ne.s32.totalorder %s288, %s289
      %p301 = scmp.eq.s32.totalorder %s28, 1
      %p302 = por %p300, %p301
      %p304 = scmp.ne.s32.totalorder %s289, %s303
      %p305 = scmp.eq.s32.totalorder %s28, 0
      %p306 = por %p304, %p305
      %s308 = sadd.s32 %s307, 1
      %p311 = scmp.eq.s32.totalorder %s22, 1
      %p312 = scmp.ne.s32.totalorder %s307, %s309
      %p313 = scmp.eq.s32.totalorder %s22, 0
      %p314 = por %p312, %p313
      %p315 = scmp.ne.s32.totalorder %s307, %s309
      %p316 = scmp.eq.s32.totalorder %s27, 1
      %p317 = por %p315, %p316
      %p318 = scmp.ne.s32.totalorder %s309, %s310
      %p319 = scmp.eq.s32.totalorder %s27, 0
      %p320 = por %p318, %p319
      %p321 = scmp.ne.s32.totalorder %s309, %s310
      %p322 = scmp.eq.s32.totalorder %s28, 1
      %p323 = por %p321, %p322
      %p325 = scmp.ne.s32.totalorder %s310, %s324
      %p326 = scmp.eq.s32.totalorder %s28, 0
      %p327 = por %p325, %p326
      %s329 = sadd.s32 %s328, 1
      %p332 = scmp.eq.s32.totalorder %s22, 1
      %p333 = scmp.ne.s32.totalorder %s328, %s330
      %p334 = scmp.eq.s32.totalorder %s22, 0
      %p335 = por %p333, %p334
      %p336 = scmp.ne.s32.totalorder %s328, %s330
      %p337 = scmp.eq.s32.totalorder %s27, 1
      %p338 = por %p336, %p337
      %p339 = scmp.ne.s32.totalorder %s330, %s331
      %p340 = scmp.eq.s32.totalorder %s27, 0
      %p341 = por %p339, %p340
      %p342 = scmp.ne.s32.totalorder %s330, %s331
      %p343 = scmp.eq.s32.totalorder %s28, 1
      %p344 = por %p342, %p343
      %p346 = scmp.ne.s32.totalorder %s331, %s345
      %p347 = scmp.eq.s32.totalorder %s28, 0
      %p348 = por %p346, %p347
      %p349 = scmp.le.s32.totalorder 1, %s22
      %p350 = scmp.lt.s32.totalorder %s22, 3
      %p351 = pnand %p349, %p350
      %p352 = pneg %p351
      // Predicated region
      $region9: #{mlp_mixer_forward.1} parent=5 // pred_check
        _
      $region10: #{mlp_mixer_forward.1} parent=5 // pred_check_branch
        %354 = sbr.rel (%p351) target = $region12
      $region11: #{mlp_mixer_forward.1} parent=5 // pred_region
        %s355 = ssub.s32 %s22, 1
        // Predicated region
        $region13: #{mlp_mixer_forward.1} parent=11 // pred_check
          %p356 = pneg %p43
        $region14: #{mlp_mixer_forward.1} parent=11 // pred_check_branch
          %358 = sbr.rel (%p356) target = $region16
        $region15: #{mlp_mixer_forward.1} parent=11 // pred_region
          _
        $region16: #{mlp_mixer_forward.1} parent=11 // pred_fallthru
          _
        // Predicated region
        $region17: #{mlp_mixer_forward.1} parent=11 // pred_check
          %p359 = pneg %p64
        $region18: #{mlp_mixer_forward.1} parent=11 // pred_check_branch
          %361 = sbr.rel (%p359) target = $region20
        $region19: #{mlp_mixer_forward.1} parent=11 // pred_region
          %s363 = ssub.s32 1024, 1024
          %364 = vsyncadd [#allocation4], %s363
          %s365 = sshll.u32 [#allocation3], 4
          %s366 = int_to_ptr.vmem [resolvable:$true] %s365
          %371 = dma.hbm_to_vmem [thread:$0]  %s1, 1024, %s366, [#allocation4], 64, 64, 4
        $region20: #{mlp_mixer_forward.1} parent=11 // pred_fallthru
          _
        // Predicated region
        $region21: #{mlp_mixer_forward.1} parent=11 // pred_check
          %p372 = pneg %p85
        $region22: #{mlp_mixer_forward.1} parent=11 // pred_check_branch
          %374 = sbr.rel (%p372) target = $region24
        $region23: #{mlp_mixer_forward.1} parent=11 // pred_region
          _
        $region24: #{mlp_mixer_forward.1} parent=11 // pred_fallthru
          _
        // Predicated region
        $region25: #{mlp_mixer_forward.1} parent=11 // pred_check
          %p375 = pneg %p236
        $region26: #{mlp_mixer_forward.1} parent=11 // pred_check_branch
          %377 = sbr.rel (%p375) target = $region28
        $region27: #{mlp_mixer_forward.1} parent=11 // pred_region
          _
        $region28: #{mlp_mixer_forward.1} parent=11 // pred_fallthru
          _
        // Predicated region
        $region29: #{mlp_mixer_forward.1} parent=11 // pred_check
          %p378 = pneg %p257
        $region30: #{mlp_mixer_forward.1} parent=11 // pred_check_branch
          %380 = sbr.rel (%p378) target = $region32
        $region31: #{mlp_mixer_forward.1} parent=11 // pred_region
          _
        $region32: #{mlp_mixer_forward.1} parent=11 // pred_fallthru
          _
        // Predicated region
        $region33: #{mlp_mixer_forward.1} parent=11 // pred_check
          %p381 = pneg %p278
        $region34: #{mlp_mixer_forward.1} parent=11 // pred_check_branch
          %383 = sbr.rel (%p381) target = $region36
        $region35: #{mlp_mixer_forward.1} parent=11 // pred_region
          %s385 = ssub.s32 1024, 1024
          %386 = vsyncadd [#allocation7], %s385
          %s387 = sshll.u32 [#allocation6], 4
          %s388 = int_to_ptr.vmem [resolvable:$true] %s387
          %393 = dma.hbm_to_vmem [thread:$0]  %s10, 1024, %s388, [#allocation7], 64, 64, 4
        $region36: #{mlp_mixer_forward.1} parent=11 // pred_fallthru
          _
        // Predicated region
        $region37: #{mlp_mixer_forward.1} parent=11 // pred_check
          %p394 = pneg %p299
        $region38: #{mlp_mixer_forward.1} parent=11 // pred_check_branch
          %396 = sbr.rel (%p394) target = $region40
        $region39: #{mlp_mixer_forward.1} parent=11 // pred_region
          _
        $region40: #{mlp_mixer_forward.1} parent=11 // pred_fallthru
          _
        // Predicated region
        $region41: #{mlp_mixer_forward.1} parent=11 // pred_check
          %p397 = pneg %p320
        $region42: #{mlp_mixer_forward.1} parent=11 // pred_check_branch
          %399 = sbr.rel (%p397) target = $region44
        $region43: #{mlp_mixer_forward.1} parent=11 // pred_region
          _
        $region44: #{mlp_mixer_forward.1} parent=11 // pred_fallthru
          _
      $region12: #{mlp_mixer_forward.1} parent=5 // pred_fallthru
        _
      %p400 = scmp.lt.s32.totalorder %s22, 2
      // Predicated region
      $region45: #{mlp_mixer_forward.1} parent=5 // pred_check
        %p401 = pneg %p400
      $region46: #{mlp_mixer_forward.1} parent=5 // pred_check_branch
        %403 = sbr.rel (%p401) target = $region48
      $region47: #{mlp_mixer_forward.1} parent=5 // pred_region
        // Predicated region
        $region49: #{mlp_mixer_forward.1} parent=47 // pred_check
          %p404 = pneg %p105
        $region50: #{mlp_mixer_forward.1} parent=47 // pred_check_branch
          %406 = sbr.rel (%p404) target = $region52
        $region51: #{mlp_mixer_forward.1} parent=47 // pred_region
          %p407 = scmp.lt.s32.totalorder %s22, 1
          %s408 = scalar_select %p407, %s22, 1
          %s409 = smul.addr %s408, 2
          %s410 = smul.addr %s409, 4
          %s411 = scalar_lea.vmem %s3, %s410
        $region52: #{mlp_mixer_forward.1} parent=47 // pred_fallthru
          _
        // Predicated region
        $region53: #{mlp_mixer_forward.1} parent=47 // pred_check
          %p412 = pneg %p131
        $region54: #{mlp_mixer_forward.1} parent=47 // pred_check_branch
          %414 = sbr.rel (%p412) target = $region56
        $region55: #{mlp_mixer_forward.1} parent=47 // pred_region
          %p415 = scmp.lt.s32.totalorder %s22, 1
          %s416 = scalar_select %p415, %s22, 1
          %s417 = smul.addr %s416, 2
          %s418 = smul.addr %s417, 4
          %s419 = scalar_lea.vmem %s4, %s418
        $region56: #{mlp_mixer_forward.1} parent=47 // pred_fallthru
          _
        // Predicated region
        $region57: #{mlp_mixer_forward.1} parent=47 // pred_check
          %p420 = pneg %p157
        $region58: #{mlp_mixer_forward.1} parent=47 // pred_check_branch
          %422 = sbr.rel (%p420) target = $region60
        $region59: #{mlp_mixer_forward.1} parent=47 // pred_region
          %p423 = scmp.lt.s32.totalorder %s22, 1
          %s424 = scalar_select %p423, %s22, 1
          %s425 = smul.addr %s424, 16
          %s426 = smul.addr %s425, 4
          %s427 = scalar_lea.vmem %s5, %s426
        $region60: #{mlp_mixer_forward.1} parent=47 // pred_fallthru
          _
        // Predicated region
        $region61: #{mlp_mixer_forward.1} parent=47 // pred_check
          %p428 = pneg %p183
        $region62: #{mlp_mixer_forward.1} parent=47 // pred_check_branch
          %430 = sbr.rel (%p428) target = $region64
        $region63: #{mlp_mixer_forward.1} parent=47 // pred_region
          %p431 = scmp.lt.s32.totalorder %s22, 1
          %s432 = scalar_select %p431, %s22, 1
          %s433 = smul.addr %s432, 16
          %s434 = smul.addr %s433, 4
          %s435 = scalar_lea.vmem %s6, %s434
        $region64: #{mlp_mixer_forward.1} parent=47 // pred_fallthru
          _
        // Predicated region
        $region65: #{mlp_mixer_forward.1} parent=47 // pred_check
          %p436 = pneg %p209
        $region66: #{mlp_mixer_forward.1} parent=47 // pred_check_branch
          %438 = sbr.rel (%p436) target = $region68
        $region67: #{mlp_mixer_forward.1} parent=47 // pred_region
          %p439 = scmp.lt.s32.totalorder %s22, 1
          %s440 = scalar_select %p439, %s22, 1
          %s441 = smul.addr %s440, 5
          %s442 = smul.addr %s441, 8
          %s443 = scalar_lea.vmem %s7, %s442
        $region68: #{mlp_mixer_forward.1} parent=47 // pred_fallthru
          _
      $region48: #{mlp_mixer_forward.1} parent=5 // pred_fallthru
        _
      %p444 = scmp.le.s32.totalorder 1, %s22
      %p445 = scmp.lt.s32.totalorder %s22, 3
      %p446 = pnand %p444, %p445
      %p447 = pneg %p446
      // Predicated region
      $region69: #{mlp_mixer_forward.1} parent=5 // pred_check
        _
      $region70: #{mlp_mixer_forward.1} parent=5 // pred_check_branch
        %449 = sbr.rel (%p446) target = $region72
      $region71: #{mlp_mixer_forward.1} parent=5 // pred_region
        %s450 = ssub.s32 %s22, 1
        // Predicated region
        $region73: #{mlp_mixer_forward.1} parent=71 // pred_check
          %p451 = pneg %p64
        $region74: #{mlp_mixer_forward.1} parent=71 // pred_check_branch
          %453 = sbr.rel (%p451) target = $region76
        $region75: #{mlp_mixer_forward.1} parent=71 // pred_region
          %454 = dma.done [#allocation4], 1024
        $region76: #{mlp_mixer_forward.1} parent=71 // pred_fallthru
          _
        // Predicated region
        $region77: #{mlp_mixer_forward.1} parent=71 // pred_check
          %p455 = pneg %p278
        $region78: #{mlp_mixer_forward.1} parent=71 // pred_check_branch
          %457 = sbr.rel (%p455) target = $region80
        $region79: #{mlp_mixer_forward.1} parent=71 // pred_region
          %458 = dma.done [#allocation7], 1024
        $region80: #{mlp_mixer_forward.1} parent=71 // pred_fallthru
          _
        %p459 = pneg %p43
        %p460 = pneg %p40
        %p461 = pneg %p64
        %p462 = pneg %p61
        %p463 = pneg %p85
        %p464 = pneg %p82
        %p465 = scmp.lt.s32.totalorder %s27, 1
        %s466 = scalar_select %p465, %s27, 1
        %s467 = smul.addr %s466, 2
        %s468 = smul.addr %s467, 4
        %s469 = scalar_lea.vmem %s3, %s468
        %p470 = pneg %p111
        %p471 = pneg %p108
        %p472 = scmp.lt.s32.totalorder %s27, 1
        %s473 = scalar_select %p472, %s27, 1
        %s474 = smul.addr %s473, 2
        %s475 = smul.addr %s474, 4
        %s476 = scalar_lea.vmem %s4, %s475
        %p477 = pneg %p137
        %p478 = pneg %p134
        %p479 = scmp.lt.s32.totalorder %s27, 1
        %s480 = scalar_select %p479, %s27, 1
        %s481 = smul.addr %s480, 16
        %s482 = smul.addr %s481, 4
        %s483 = scalar_lea.vmem %s5, %s482
        %p484 = pneg %p163
        %p485 = pneg %p160
        %p486 = scmp.lt.s32.totalorder %s27, 1
        %s487 = scalar_select %p486, %s27, 1
        %s488 = smul.addr %s487, 16
        %s489 = smul.addr %s488, 4
        %s490 = scalar_lea.vmem %s6, %s489
        %p491 = pneg %p189
        %p492 = pneg %p186
        %p493 = scmp.lt.s32.totalorder %s27, 1
        %s494 = scalar_select %p493, %s27, 1
        %s495 = smul.addr %s494, 5
        %s496 = smul.addr %s495, 8
        %s497 = scalar_lea.vmem %s7, %s496
        %p498 = pneg %p215
        %p499 = pneg %p212
        %p500 = pneg %p236
        %p501 = pneg %p233
        %p502 = pneg %p257
        %p503 = pneg %p254
        %p504 = pneg %p278
        %p505 = pneg %p275
        %p506 = pneg %p299
        %p507 = pneg %p296
        %p508 = pneg %p320
        %p509 = pneg %p317
        %p510 = pneg %p341
        %p511 = pneg %p338
        %p512 = scmp.lt.s32.totalorder %s27, 1
        %s513 = scalar_select %p512, %s27, 1
        %s514 = smul.addr %s513, 2
        %s515 = smul.addr %s514, 4
        %s516 = scalar_lea.vmem %s3, %s515
        %p517 = scmp.lt.s32.totalorder %s27, 1
        %s518 = scalar_select %p517, %s27, 1
        %s519 = smul.addr %s518, 2
        %s520 = smul.addr %s519, 4
        %s521 = scalar_lea.vmem %s4, %s520
        %p522 = scmp.lt.s32.totalorder %s27, 1
        %s523 = scalar_select %p522, %s27, 1
        %s524 = smul.addr %s523, 16
        %s525 = smul.addr %s524, 4
        %s526 = scalar_lea.vmem %s5, %s525
        %p527 = scmp.lt.s32.totalorder %s27, 1
        %s528 = scalar_select %p527, %s27, 1
        %s529 = smul.addr %s528, 16
        %s530 = smul.addr %s529, 4
        %s531 = scalar_lea.vmem %s6, %s530
        %p532 = scmp.lt.s32.totalorder %s27, 1
        %s533 = scalar_select %p532, %s27, 1
        %s534 = smul.addr %s533, 5
        %s535 = smul.addr %s534, 8
        %s536 = scalar_lea.vmem %s7, %s535
        %p538 = scmp.eq.s32.totalorder %s27, 0
        // Predicated region
        $region81: #{mlp_mixer_forward.1} parent=71 // pred_check
          %p539 = pneg %p538
        $region82: #{mlp_mixer_forward.1} parent=71 // pred_check_branch
          %541 = sbr.rel (%p539) target = $region84
        $region83: #{mlp_mixer_forward.1} parent=71 // pred_region
          %v542 = vld [vmem:[%s0] sm:$0xf]
          %v543 = vld [vmem:[%s0 + $0x4] sm:$0xf]
          %v544 = vld [vmem:[%s0 + $0x8] sm:$0xf]
          %v545 = vld [vmem:[%s0 + $0xc] sm:$0xf]
          %v546 = vld [vmem:[#allocation3] sm:$0xf]
          %v547 = vld [vmem:[#allocation3 + $0x4] sm:$0xf]
          %v548 = vld [vmem:[#allocation3 + $0x8] sm:$0xf]
          %v549 = vld [vmem:[#allocation3 + $0xc] sm:$0xf]
          %v550 = vld [vmem:[#allocation3 + $0x10] sm:$0xf]
          %v551 = vld [vmem:[#allocation3 + $0x14] sm:$0xf]
          %v552 = vld [vmem:[#allocation3 + $0x18] sm:$0xf]
          %v553 = vld [vmem:[#allocation3 + $0x1c] sm:$0xf]
          %v554 = vld [vmem:[#allocation3 + $0x20] sm:$0xf]
          %v555 = vld [vmem:[#allocation3 + $0x24] sm:$0xf]
          %v556 = vld [vmem:[#allocation3 + $0x28] sm:$0xf]
          %v557 = vld [vmem:[#allocation3 + $0x2c] sm:$0xf]
          %v558 = vld [vmem:[#allocation3 + $0x30] sm:$0xf]
          %v559 = vld [vmem:[#allocation3 + $0x34] sm:$0xf]
          %v560 = vld [vmem:[#allocation3 + $0x38] sm:$0xf]
          %v561 = vld [vmem:[#allocation3 + $0x3c] sm:$0xf]
          %v562 = vld [vmem:[%s2] sm:$0x1]
          %v564 = vlaneseq
          %v565 = vshrl.u32 %v564, 7
          %v566 = vsub.s32 0, %v565
          %v567 = vrot.slane %v562, %v566
          %v573 = vunpack.c.l.b16 %v542
          %v574 = vunpack.c.l.b16 %v543
          %v575 = vunpack.c.l.b16 %v544
          %v576 = vunpack.c.l.b16 %v545
          %v577 = vpack.c.b16 %v574, %v573
          %v578 = vpack.c.b16 %v576, %v575
          %v597 = vunpack.c.l.b16 %v546
          %v598 = vunpack.c.l.b16 %v547
          %v599 = vunpack.c.l.b16 %v548
          %v600 = vunpack.c.l.b16 %v549
          %v601 = vunpack.c.l.b16 %v550
          %v602 = vunpack.c.l.b16 %v551
          %v603 = vunpack.c.l.b16 %v552
          %v604 = vunpack.c.l.b16 %v553
          %v605 = vunpack.c.l.b16 %v554
          %v606 = vunpack.c.l.b16 %v555
          %v607 = vunpack.c.l.b16 %v556
          %v608 = vunpack.c.l.b16 %v557
          %v609 = vunpack.c.l.b16 %v558
          %v610 = vunpack.c.l.b16 %v559
          %v611 = vunpack.c.l.b16 %v560
          %v612 = vunpack.c.l.b16 %v561
          %v613 = vpack.c.b16 %v598, %v597
          %v614 = vpack.c.b16 %v600, %v599
          %v615 = vpack.c.b16 %v602, %v601
          %v616 = vpack.c.b16 %v604, %v603
          %v617 = vpack.c.b16 %v606, %v605
          %v618 = vpack.c.b16 %v608, %v607
          %v619 = vpack.c.b16 %v610, %v609
          %v620 = vpack.c.b16 %v612, %v611
          %629 = vmatprep.subr.bf16.mxu0 0
          %630 = vmatpush1.bf16.msra.mxu0 %v620
          %631 = vmatprep.subr.bf16.mxu0 0
          %632 = vmatpush1.bf16.msra.mxu0 %v619
          %633 = vmatprep.subr.bf16.mxu0 0
          %634 = vmatpush1.bf16.msra.mxu0 %v618
          %635 = vmatprep.subr.bf16.mxu0 0
          %636 = vmatpush1.bf16.msra.mxu0 %v617
          %637 = vmatprep.subr.bf16.mxu0 0
          %638 = vmatpush1.bf16.msra.mxu0 %v616
          %639 = vmatprep.subr.bf16.mxu0 0
          %640 = vmatpush1.bf16.msra.mxu0 %v615
          %641 = vmatprep.subr.bf16.mxu0 0
          %642 = vmatpush1.bf16.msra.mxu0 %v614
          %643 = vmatprep.subr.bf16.mxu0 0
          %644 = vmatpush1.bf16.msra.mxu0 %v613
          %645 = vmatprep.subr.bf16.mxu0 0
          %646 = vmatpush2.bf16.msra.mxu0 0
          %647 = vmatprep.subr.bf16.mxu0 0
          %648 = vmatpush2.bf16.msra.mxu0 0
          %649 = vmatprep.subr.bf16.mxu0 0
          %650 = vmatpush2.bf16.msra.mxu0 0
          %651 = vmatprep.subr.bf16.mxu0 0
          %652 = vmatpush2.bf16.msra.mxu0 0
          %653 = vmatprep.subr.bf16.mxu0 0
          %654 = vmatpush2.bf16.msra.mxu0 0
          %655 = vmatprep.subr.bf16.mxu0 0
          %656 = vmatpush2.bf16.msra.mxu0 0
          %657 = vmatprep.subr.bf16.mxu0 0
          %658 = vmatpush2.bf16.msra.mxu0 0
          %659 = vmatprep.subr.bf16.mxu0 0
          %660 = vmatpush2.bf16.msra.mxu0 0
          %661 = vmatprep.mubr.bf16.mxu0 0
          %662 = vmatmul.mubr.bf16.gmra.mxu0 %v577
          %v663 = vpop.f32.mrf.mxu0
          %v664 = vadd.f32 %v567, %v663
          %v665 = vpop.f32.mrf.mxu0
          %v666 = vpop.f32.mrf.mxu0
          %v667 = vadd.f32 %v567, %v666
          %v668 = vpop.f32.mrf.mxu0
          %669 = vmatprep.mubr.bf16.mxu0 0
          %670 = vmatmul.mubr.bf16.gmra.mxu0 %v578
          %v671 = vpop.f32.mrf.mxu0
          %v672 = vadd.f32 %v567, %v671
          %v673 = vpop.f32.mrf.mxu0
          %v674 = vpop.f32.mrf.mxu0
          %v675 = vadd.f32 %v567, %v674
          %v676 = vpop.f32.mrf.mxu0
          %677 = vdwg.mxu0
          %678 = vst [vmem:[#allocation2] sm:$0xff] %v664
          %679 = vst [vmem:[#allocation2 + $0x8] sm:$0xff] %v667
          %680 = vst [vmem:[#allocation2 + $0x10] sm:$0xff] %v672
          %681 = vst [vmem:[#allocation2 + $0x18] sm:$0xff] %v675
        $region84: #{mlp_mixer_forward.1} parent=71 // pred_fallthru
          _
        %v682 = vld [vmem:[#allocation2] sm:$0xff]
        %v683 = vld [vmem:[#allocation2 + $0x8] sm:$0xff]
        %v684 = vld [vmem:[#allocation2 + $0x10] sm:$0xff]
        %v685 = vld [vmem:[#allocation2 + $0x18] sm:$0xff]
        %v686 = vld [vmem:[%s536] sm:$0xff]
        %v687 = vld [vmem:[%s536 + $0x8] sm:$0xff]
        %v688 = vld [vmem:[%s536 + $0x10] sm:$0xff]
        %v689 = vld [vmem:[%s536 + $0x18] sm:$0xff]
        %v690 = vld [vmem:[%s536 + $0x20] sm:$0xff]
        %691 = vadd.xlane.f32.xlu0 %v682
        %v692 = vpop.xlane.xlu0 %691
        %693 = vadd.xlane.f32.xlu0 %v683
        %v694 = vpop.xlane.xlu0 %693
        %695 = vadd.xlane.f32.xlu0 %v684
        %v696 = vpop.xlane.xlu0 %695
        %697 = vadd.xlane.f32.xlu0 %v685
        %v698 = vpop.xlane.xlu0 %697
        %v699 = vmul.f32 %v692, 0.03125
        %v700 = vmul.f32 %v694, 0.03125
        %v701 = vmul.f32 %v696, 0.03125
        %v702 = vmul.f32 %v698, 0.03125
        %v703 = vmul.f32 %v682, %v682
        %v704 = vmul.f32 %v683, %v683
        %v705 = vmul.f32 %v684, %v684
        %v706 = vmul.f32 %v685, %v685
        %707 = vadd.xlane.f32.xlu0 %v703
        %v708 = vpop.xlane.xlu0 %707
        %709 = vadd.xlane.f32.xlu0 %v704
        %v710 = vpop.xlane.xlu0 %709
        %711 = vadd.xlane.f32.xlu0 %v705
        %v712 = vpop.xlane.xlu0 %711
        %713 = vadd.xlane.f32.xlu0 %v706
        %v714 = vpop.xlane.xlu0 %713
        %v715 = vmul.f32 %v708, 0.03125
        %v716 = vmul.f32 %v710, 0.03125
        %v717 = vmul.f32 %v712, 0.03125
        %v718 = vmul.f32 %v714, 0.03125
        %v719 = vmul.f32 %v699, %v699
        %v720 = vmul.f32 %v700, %v700
        %v721 = vmul.f32 %v701, %v701
        %v722 = vmul.f32 %v702, %v702
        %v723 = vsub.f32 %v715, %v719
        %v724 = vsub.f32 %v716, %v720
        %v725 = vsub.f32 %v717, %v721
        %v726 = vsub.f32 %v718, %v722
        %v727 = vsub.f32 %v682, %v699
        %v728 = vsub.f32 %v683, %v700
        %v729 = vsub.f32 %v684, %v701
        %v730 = vsub.f32 %v685, %v702
        %v731 = vadd.f32 %v723, 1e-05
        %v732 = vadd.f32 %v724, 1e-05
        %v733 = vadd.f32 %v725, 1e-05
        %v734 = vadd.f32 %v726, 1e-05
        %v735 = vrsqrt.pop %v731
        %v736 = vrsqrt.pop %v732
        %v737 = vrsqrt.pop %v733
        %v738 = vrsqrt.pop %v734
        %v739 = vlaneseq
        %v740 = vshrl.u32 %v739, 7
        %v741 = vsub.s32 0, %v740
        %v742 = vrot.slane %v686, %v741
        %v743 = vmul.f32 %v735, %v742
        %v744 = vmul.f32 %v736, %v742
        %v745 = vmul.f32 %v737, %v742
        %v746 = vmul.f32 %v738, %v742
        %v747 = vmul.f32 %v727, %v743
        %v748 = vmul.f32 %v728, %v744
        %v749 = vmul.f32 %v729, %v745
        %v750 = vmul.f32 %v730, %v746
        %v751 = vlaneseq
        %v752 = vshrl.u32 %v751, 7
        %v753 = vsub.s32 1, %v752
        %v754 = vrot.slane %v686, %v753
        %v755 = vadd.f32 %v747, %v754
        %v756 = vadd.f32 %v748, %v754
        %v757 = vadd.f32 %v749, %v754
        %v758 = vadd.f32 %v750, %v754
        %v759 = vpack.c.bf16 %v756, %v755
        %v760 = vpack.c.bf16 %v758, %v757
        %v761 = vld [vmem:[%s516] sm:$0xf]
        %v762 = vld [vmem:[%s516 + $0x4] sm:$0xf]
        %v765 = vunpack.c.l.b16 %v761
        %v766 = vunpack.c.l.b16 %v762
        %v767 = vpack.c.b16 %v766, %v765
        %vm768 = vcmask 130048
        %v770 = vsel %vm768, %v767, 0
        %772 = vmatprep.subr.bf16.mxu0 0
        %773 = vmatpush1.bf16.msra.mxu0 0
        %774 = vmatprep.subr.bf16.mxu0 0
        %775 = vmatpush1.bf16.msra.mxu0 0
        %776 = vmatprep.subr.bf16.mxu0 0
        %777 = vmatpush1.bf16.msra.mxu0 0
        %778 = vmatprep.subr.bf16.mxu0 0
        %779 = vmatpush1.bf16.msra.mxu0 0
        %780 = vmatprep.subr.bf16.mxu0 0
        %781 = vmatpush1.bf16.msra.mxu0 0
        %782 = vmatprep.subr.bf16.mxu0 0
        %783 = vmatpush1.bf16.msra.mxu0 0
        %784 = vmatprep.subr.bf16.mxu0 0
        %785 = vmatpush1.bf16.msra.mxu0 0
        %786 = vmatprep.subr.bf16.mxu0 0
        %787 = vmatpush1.bf16.msra.mxu0 %v759
        %788 = vmatprep.subr.bf16.mxu0 0
        %789 = vmatpush2.bf16.msra.mxu0 0
        %790 = vmatprep.subr.bf16.mxu0 0
        %791 = vmatpush2.bf16.msra.mxu0 0
        %792 = vmatprep.subr.bf16.mxu0 0
        %793 = vmatpush2.bf16.msra.mxu0 0
        %794 = vmatprep.subr.bf16.mxu0 0
        %795 = vmatpush2.bf16.msra.mxu0 0
        %796 = vmatprep.subr.bf16.mxu0 0
        %797 = vmatpush2.bf16.msra.mxu0 0
        %798 = vmatprep.subr.bf16.mxu0 0
        %799 = vmatpush2.bf16.msra.mxu0 0
        %800 = vmatprep.subr.bf16.mxu0 0
        %801 = vmatpush2.bf16.msra.mxu0 0
        %802 = vmatprep.subr.bf16.mxu0 0
        %803 = vmatpush2.bf16.msra.mxu0 0
        %804 = vmatprep.mubr.bf16.mxu0 0
        %805 = vmatmul.mubr.bf16.gmra.mxu0 %v770
        %v806 = vpop.f32.mrf.mxu0
        %v807 = vadd.f32 %v687, %v806
        %v808 = vpop.f32.mrf.mxu0
        %v809 = vpop.f32.mrf.mxu0
        %v810 = vadd.f32 %v688, %v809
        %v811 = vpop.f32.mrf.mxu0
        %812 = vdwg.mxu0
        %813 = vmatprep.subr.bf16.mxu0 0
        %814 = vmatpush1.bf16.msra.mxu0 0
        %815 = vmatprep.subr.bf16.mxu0 0
        %816 = vmatpush1.bf16.msra.mxu0 0
        %817 = vmatprep.subr.bf16.mxu0 0
        %818 = vmatpush1.bf16.msra.mxu0 0
        %819 = vmatprep.subr.bf16.mxu0 0
        %820 = vmatpush1.bf16.msra.mxu0 0
        %821 = vmatprep.subr.bf16.mxu0 0
        %822 = vmatpush1.bf16.msra.mxu0 0
        %823 = vmatprep.subr.bf16.mxu0 0
        %824 = vmatpush1.bf16.msra.mxu0 0
        %825 = vmatprep.subr.bf16.mxu0 0
        %826 = vmatpush1.bf16.msra.mxu0 0
        %827 = vmatprep.subr.bf16.mxu0 0
        %828 = vmatpush1.bf16.msra.mxu0 %v760
        %829 = vmatprep.subr.bf16.mxu0 0
        %830 = vmatpush2.bf16.msra.mxu0 0
        %831 = vmatprep.subr.bf16.mxu0 0
        %832 = vmatpush2.bf16.msra.mxu0 0
        %833 = vmatprep.subr.bf16.mxu0 0
        %834 = vmatpush2.bf16.msra.mxu0 0
        %835 = vmatprep.subr.bf16.mxu0 0
        %836 = vmatpush2.bf16.msra.mxu0 0
        %837 = vmatprep.subr.bf16.mxu0 0
        %838 = vmatpush2.bf16.msra.mxu0 0
        %839 = vmatprep.subr.bf16.mxu0 0
        %840 = vmatpush2.bf16.msra.mxu0 0
        %841 = vmatprep.subr.bf16.mxu0 0
        %842 = vmatpush2.bf16.msra.mxu0 0
        %843 = vmatprep.subr.bf16.mxu0 0
        %844 = vmatpush2.bf16.msra.mxu0 0
        %845 = vmatprep.mubr.bf16.mxu0 0
        %846 = vmatmul.mubr.bf16.gmra.mxu0 %v770
        %v847 = vpop.f32.mrf.mxu0
        %v848 = vadd.f32 %v687, %v847
        %v849 = vpop.f32.mrf.mxu0
        %v850 = vpop.f32.mrf.mxu0
        %v851 = vadd.f32 %v688, %v850
        %v852 = vpop.f32.mrf.mxu0
        %853 = vdwg.mxu0
        %v854 = vmul.f32 %v807, 0.5
        %v855 = vmul.f32 %v810, 0.5
        %v856 = vmul.f32 %v848, 0.5
        %v857 = vmul.f32 %v851, 0.5
        %v858 = vmul.f32 %v807, 0.044715
        %v859 = vmul.f32 %v810, 0.044715
        %v860 = vmul.f32 %v848, 0.044715
        %v861 = vmul.f32 %v851, 0.044715
        %v862 = vmul.f32 %v858, %v807
        %v863 = vmul.f32 %v859, %v810
        %v864 = vmul.f32 %v860, %v848
        %v865 = vmul.f32 %v861, %v851
        %v866 = vmul.f32 %v862, %v807
        %v867 = vmul.f32 %v863, %v810
        %v868 = vmul.f32 %v864, %v848
        %v869 = vmul.f32 %v865, %v851
        %v870 = vadd.f32 %v807, %v866
        %v871 = vadd.f32 %v810, %v867
        %v872 = vadd.f32 %v848, %v868
        %v873 = vadd.f32 %v851, %v869
        %v874 = vmul.f32 %v870, 0.7978846
        %v875 = vmul.f32 %v871, 0.7978846
        %v876 = vmul.f32 %v872, 0.7978846
        %v877 = vmul.f32 %v873, 0.7978846
        %v878 = vtanh.pop %v874
        %v879 = vtanh.pop %v875
        %v880 = vtanh.pop %v876
        %v881 = vtanh.pop %v877
        %v882 = vadd.f32 %v878, 1.0
        %v883 = vadd.f32 %v879, 1.0
        %v884 = vadd.f32 %v880, 1.0
        %v885 = vadd.f32 %v881, 1.0
        %v886 = vmul.f32 %v854, %v882
        %v887 = vmul.f32 %v855, %v883
        %v888 = vmul.f32 %v856, %v884
        %v889 = vmul.f32 %v857, %v885
        %v890 = vpack.c.bf16 %v887, %v886
        %v891 = vpack.c.bf16 %v889, %v888
        %v892 = vld [vmem:[%s521] sm:$0xf]
        %v893 = vld [vmem:[%s521 + $0x4] sm:$0xf]
        %v896 = vunpack.c.l.b16 %v892
        %v897 = vunpack.c.l.b16 %v893
        %v898 = vpack.c.b16 %v897, %v896
        %v900 = vsel %vm768, %v898, 0
        %902 = vmatprep.subr.bf16.mxu0 0
        %903 = vmatpush1.bf16.msra.mxu0 0
        %904 = vmatprep.subr.bf16.mxu0 0
        %905 = vmatpush1.bf16.msra.mxu0 0
        %906 = vmatprep.subr.bf16.mxu0 0
        %907 = vmatpush1.bf16.msra.mxu0 0
        %908 = vmatprep.subr.bf16.mxu0 0
        %909 = vmatpush1.bf16.msra.mxu0 0
        %910 = vmatprep.subr.bf16.mxu0 0
        %911 = vmatpush1.bf16.msra.mxu0 0
        %912 = vmatprep.subr.bf16.mxu0 0
        %913 = vmatpush1.bf16.msra.mxu0 0
        %914 = vmatprep.subr.bf16.mxu0 0
        %915 = vmatpush1.bf16.msra.mxu0 0
        %916 = vmatprep.subr.bf16.mxu0 0
        %917 = vmatpush1.bf16.msra.mxu0 %v890
        %918 = vmatprep.subr.bf16.mxu0 0
        %919 = vmatpush2.bf16.msra.mxu0 0
        %920 = vmatprep.subr.bf16.mxu0 0
        %921 = vmatpush2.bf16.msra.mxu0 0
        %922 = vmatprep.subr.bf16.mxu0 0
        %923 = vmatpush2.bf16.msra.mxu0 0
        %924 = vmatprep.subr.bf16.mxu0 0
        %925 = vmatpush2.bf16.msra.mxu0 0
        %926 = vmatprep.subr.bf16.mxu0 0
        %927 = vmatpush2.bf16.msra.mxu0 0
        %928 = vmatprep.subr.bf16.mxu0 0
        %929 = vmatpush2.bf16.msra.mxu0 0
        %930 = vmatprep.subr.bf16.mxu0 0
        %931 = vmatpush2.bf16.msra.mxu0 0
        %932 = vmatprep.subr.bf16.mxu0 0
        %933 = vmatpush2.bf16.msra.mxu0 0
        %934 = vmatprep.mubr.bf16.mxu0 0
        %935 = vmatmul.mubr.bf16.gmra.mxu0 %v900
        %v936 = vpop.f32.mrf.mxu0
        %v937 = vadd.f32 %v689, %v936
        %v938 = vpop.f32.mrf.mxu0
        %v939 = vpop.f32.mrf.mxu0
        %v940 = vadd.f32 %v690, %v939
        %v941 = vpop.f32.mrf.mxu0
        %942 = vdwg.mxu0
        %943 = vmatprep.subr.bf16.mxu0 0
        %944 = vmatpush1.bf16.msra.mxu0 0
        %945 = vmatprep.subr.bf16.mxu0 0
        %946 = vmatpush1.bf16.msra.mxu0 0
        %947 = vmatprep.subr.bf16.mxu0 0
        %948 = vmatpush1.bf16.msra.mxu0 0
        %949 = vmatprep.subr.bf16.mxu0 0
        %950 = vmatpush1.bf16.msra.mxu0 0
        %951 = vmatprep.subr.bf16.mxu0 0
        %952 = vmatpush1.bf16.msra.mxu0 0
        %953 = vmatprep.subr.bf16.mxu0 0
        %954 = vmatpush1.bf16.msra.mxu0 0
        %955 = vmatprep.subr.bf16.mxu0 0
        %956 = vmatpush1.bf16.msra.mxu0 0
        %957 = vmatprep.subr.bf16.mxu0 0
        %958 = vmatpush1.bf16.msra.mxu0 %v891
        %959 = vmatprep.subr.bf16.mxu0 0
        %960 = vmatpush2.bf16.msra.mxu0 0
        %961 = vmatprep.subr.bf16.mxu0 0
        %962 = vmatpush2.bf16.msra.mxu0 0
        %963 = vmatprep.subr.bf16.mxu0 0
        %964 = vmatpush2.bf16.msra.mxu0 0
        %965 = vmatprep.subr.bf16.mxu0 0
        %966 = vmatpush2.bf16.msra.mxu0 0
        %967 = vmatprep.subr.bf16.mxu0 0
        %968 = vmatpush2.bf16.msra.mxu0 0
        %969 = vmatprep.subr.bf16.mxu0 0
        %970 = vmatpush2.bf16.msra.mxu0 0
        %971 = vmatprep.subr.bf16.mxu0 0
        %972 = vmatpush2.bf16.msra.mxu0 0
        %973 = vmatprep.subr.bf16.mxu0 0
        %974 = vmatpush2.bf16.msra.mxu0 0
        %975 = vmatprep.mubr.bf16.mxu0 0
        %976 = vmatmul.mubr.bf16.gmra.mxu0 %v900
        %v977 = vpop.f32.mrf.mxu0
        %v978 = vadd.f32 %v689, %v977
        %v979 = vpop.f32.mrf.mxu0
        %v980 = vpop.f32.mrf.mxu0
        %v981 = vadd.f32 %v690, %v980
        %v982 = vpop.f32.mrf.mxu0
        %983 = vdwg.mxu0
        %v984 = vadd.f32 %v682, %v937
        %v985 = vadd.f32 %v683, %v940
        %v986 = vadd.f32 %v684, %v978
        %v987 = vadd.f32 %v685, %v981
        %988 = vadd.xlane.f32.xlu0 %v984
        %v989 = vpop.xlane.xlu0 %988
        %990 = vadd.xlane.f32.xlu0 %v985
        %v991 = vpop.xlane.xlu0 %990
        %992 = vadd.xlane.f32.xlu0 %v986
        %v993 = vpop.xlane.xlu0 %992
        %994 = vadd.xlane.f32.xlu0 %v987
        %v995 = vpop.xlane.xlu0 %994
        %v996 = vmul.f32 %v989, 0.03125
        %v997 = vmul.f32 %v991, 0.03125
        %v998 = vmul.f32 %v993, 0.03125
        %v999 = vmul.f32 %v995, 0.03125
        %v1000 = vmul.f32 %v984, %v984
        %v1001 = vmul.f32 %v985, %v985
        %v1002 = vmul.f32 %v986, %v986
        %v1003 = vmul.f32 %v987, %v987
        %1004 = vadd.xlane.f32.xlu0 %v1000
        %v1005 = vpop.xlane.xlu0 %1004
        %1006 = vadd.xlane.f32.xlu0 %v1001
        %v1007 = vpop.xlane.xlu0 %1006
        %1008 = vadd.xlane.f32.xlu0 %v1002
        %v1009 = vpop.xlane.xlu0 %1008
        %1010 = vadd.xlane.f32.xlu0 %v1003
        %v1011 = vpop.xlane.xlu0 %1010
        %v1012 = vmul.f32 %v1005, 0.03125
        %v1013 = vmul.f32 %v1007, 0.03125
        %v1014 = vmul.f32 %v1009, 0.03125
        %v1015 = vmul.f32 %v1011, 0.03125
        %v1016 = vmul.f32 %v996, %v996
        %v1017 = vmul.f32 %v997, %v997
        %v1018 = vmul.f32 %v998, %v998
        %v1019 = vmul.f32 %v999, %v999
        %v1020 = vsub.f32 %v1012, %v1016
        %v1021 = vsub.f32 %v1013, %v1017
        %v1022 = vsub.f32 %v1014, %v1018
        %v1023 = vsub.f32 %v1015, %v1019
        %v1024 = vsub.f32 %v984, %v996
        %v1025 = vsub.f32 %v985, %v997
        %v1026 = vsub.f32 %v986, %v998
        %v1027 = vsub.f32 %v987, %v999
        %v1028 = vadd.f32 %v1020, 1e-05
        %v1029 = vadd.f32 %v1021, 1e-05
        %v1030 = vadd.f32 %v1022, 1e-05
        %v1031 = vadd.f32 %v1023, 1e-05
        %v1032 = vrsqrt.pop %v1028
        %v1033 = vrsqrt.pop %v1029
        %v1034 = vrsqrt.pop %v1030
        %v1035 = vrsqrt.pop %v1031
        %v1036 = vlaneseq
        %v1037 = vshrl.u32 %v1036, 7
        %v1038 = vsub.s32 2, %v1037
        %v1039 = vrot.slane %v686, %v1038
        %v1040 = vmul.f32 %v1032, %v1039
        %v1041 = vmul.f32 %v1033, %v1039
        %v1042 = vmul.f32 %v1034, %v1039
        %v1043 = vmul.f32 %v1035, %v1039
        %v1044 = vmul.f32 %v1024, %v1040
        %v1045 = vmul.f32 %v1025, %v1041
        %v1046 = vmul.f32 %v1026, %v1042
        %v1047 = vmul.f32 %v1027, %v1043
        %v1048 = vlaneseq
        %v1049 = vshrl.u32 %v1048, 7
        %v1050 = vsub.s32 3, %v1049
        %v1051 = vrot.slane %v686, %v1050
        %v1052 = vadd.f32 %v1044, %v1051
        %v1053 = vadd.f32 %v1045, %v1051
        %v1054 = vadd.f32 %v1046, %v1051
        %v1055 = vadd.f32 %v1047, %v1051
        %v1056 = vpack.c.bf16 %v1053, %v1052
        %v1057 = vpack.c.bf16 %v1055, %v1054
        %v1058 = vld [vmem:[%s526] sm:$0xf]
        %v1059 = vld [vmem:[%s526 + $0x4] sm:$0xf]
        %v1060 = vld [vmem:[%s526 + $0x8] sm:$0xf]
        %v1061 = vld [vmem:[%s526 + $0xc] sm:$0xf]
        %v1062 = vld [vmem:[%s526 + $0x10] sm:$0xf]
        %v1063 = vld [vmem:[%s526 + $0x14] sm:$0xf]
        %v1064 = vld [vmem:[%s526 + $0x18] sm:$0xf]
        %v1065 = vld [vmem:[%s526 + $0x1c] sm:$0xf]
        %v1066 = vld [vmem:[%s526 + $0x20] sm:$0xf]
        %v1067 = vld [vmem:[%s526 + $0x24] sm:$0xf]
        %v1068 = vld [vmem:[%s526 + $0x28] sm:$0xf]
        %v1069 = vld [vmem:[%s526 + $0x2c] sm:$0xf]
        %v1070 = vld [vmem:[%s526 + $0x30] sm:$0xf]
        %v1071 = vld [vmem:[%s526 + $0x34] sm:$0xf]
        %v1072 = vld [vmem:[%s526 + $0x38] sm:$0xf]
        %v1073 = vld [vmem:[%s526 + $0x3c] sm:$0xf]
        %v1074 = vlaneseq
        %v1075 = vshrl.u32 %v1074, 7
        %v1076 = vsub.s32 4, %v1075
        %v1077 = vrot.slane %v686, %v1076
        %v1094 = vunpack.c.l.b16 %v1058
        %v1095 = vunpack.c.l.b16 %v1059
        %v1096 = vunpack.c.l.b16 %v1060
        %v1097 = vunpack.c.l.b16 %v1061
        %v1098 = vunpack.c.l.b16 %v1062
        %v1099 = vunpack.c.l.b16 %v1063
        %v1100 = vunpack.c.l.b16 %v1064
        %v1101 = vunpack.c.l.b16 %v1065
        %v1102 = vunpack.c.l.b16 %v1066
        %v1103 = vunpack.c.l.b16 %v1067
        %v1104 = vunpack.c.l.b16 %v1068
        %v1105 = vunpack.c.l.b16 %v1069
        %v1106 = vunpack.c.l.b16 %v1070
        %v1107 = vunpack.c.l.b16 %v1071
        %v1108 = vunpack.c.l.b16 %v1072
        %v1109 = vunpack.c.l.b16 %v1073
        %v1110 = vpack.c.b16 %v1095, %v1094
        %v1111 = vpack.c.b16 %v1097, %v1096
        %v1112 = vpack.c.b16 %v1099, %v1098
        %v1113 = vpack.c.b16 %v1101, %v1100
        %v1114 = vpack.c.b16 %v1103, %v1102
        %v1115 = vpack.c.b16 %v1105, %v1104
        %v1116 = vpack.c.b16 %v1107, %v1106
        %v1117 = vpack.c.b16 %v1109, %v1108
        %1126 = vmatprep.subr.bf16.mxu0 0
        %1127 = vmatpush1.bf16.msra.mxu0 %v1117
        %1128 = vmatprep.subr.bf16.mxu0 0
        %1129 = vmatpush1.bf16.msra.mxu0 %v1116
        %1130 = vmatprep.subr.bf16.mxu0 0
        %1131 = vmatpush1.bf16.msra.mxu0 %v1115
        %1132 = vmatprep.subr.bf16.mxu0 0
        %1133 = vmatpush1.bf16.msra.mxu0 %v1114
        %1134 = vmatprep.subr.bf16.mxu0 0
        %1135 = vmatpush1.bf16.msra.mxu0 %v1113
        %1136 = vmatprep.subr.bf16.mxu0 0
        %1137 = vmatpush1.bf16.msra.mxu0 %v1112
        %1138 = vmatprep.subr.bf16.mxu0 0
        %1139 = vmatpush1.bf16.msra.mxu0 %v1111
        %1140 = vmatprep.subr.bf16.mxu0 0
        %1141 = vmatpush1.bf16.msra.mxu0 %v1110
        %1142 = vmatprep.subr.bf16.mxu0 0
        %1143 = vmatpush2.bf16.msra.mxu0 0
        %1144 = vmatprep.subr.bf16.mxu0 0
        %1145 = vmatpush2.bf16.msra.mxu0 0
        %1146 = vmatprep.subr.bf16.mxu0 0
        %1147 = vmatpush2.bf16.msra.mxu0 0
        %1148 = vmatprep.subr.bf16.mxu0 0
        %1149 = vmatpush2.bf16.msra.mxu0 0
        %1150 = vmatprep.subr.bf16.mxu0 0
        %1151 = vmatpush2.bf16.msra.mxu0 0
        %1152 = vmatprep.subr.bf16.mxu0 0
        %1153 = vmatpush2.bf16.msra.mxu0 0
        %1154 = vmatprep.subr.bf16.mxu0 0
        %1155 = vmatpush2.bf16.msra.mxu0 0
        %1156 = vmatprep.subr.bf16.mxu0 0
        %1157 = vmatpush2.bf16.msra.mxu0 0
        %1158 = vmatprep.mubr.bf16.mxu0 0
        %1159 = vmatmul.mubr.bf16.gmra.mxu0 %v1056
        %v1160 = vpop.f32.mrf.mxu0
        %v1161 = vadd.f32 %v1077, %v1160
        %v1162 = vpop.f32.mrf.mxu0
        %v1163 = vpop.f32.mrf.mxu0
        %v1164 = vadd.f32 %v1077, %v1163
        %v1165 = vpop.f32.mrf.mxu0
        %1166 = vmatprep.mubr.bf16.mxu0 0
        %1167 = vmatmul.mubr.bf16.gmra.mxu0 %v1057
        %v1168 = vpop.f32.mrf.mxu0
        %v1169 = vadd.f32 %v1077, %v1168
        %v1170 = vpop.f32.mrf.mxu0
        %v1171 = vpop.f32.mrf.mxu0
        %v1172 = vadd.f32 %v1077, %v1171
        %v1173 = vpop.f32.mrf.mxu0
        %1174 = vdwg.mxu0
        %v1175 = vmul.f32 %v1161, 0.5
        %v1176 = vmul.f32 %v1164, 0.5
        %v1177 = vmul.f32 %v1169, 0.5
        %v1178 = vmul.f32 %v1172, 0.5
        %v1179 = vmul.f32 %v1161, 0.044715
        %v1180 = vmul.f32 %v1164, 0.044715
        %v1181 = vmul.f32 %v1169, 0.044715
        %v1182 = vmul.f32 %v1172, 0.044715
        %v1183 = vmul.f32 %v1179, %v1161
        %v1184 = vmul.f32 %v1180, %v1164
        %v1185 = vmul.f32 %v1181, %v1169
        %v1186 = vmul.f32 %v1182, %v1172
        %v1187 = vmul.f32 %v1183, %v1161
        %v1188 = vmul.f32 %v1184, %v1164
        %v1189 = vmul.f32 %v1185, %v1169
        %v1190 = vmul.f32 %v1186, %v1172
        %v1191 = vadd.f32 %v1161, %v1187
        %v1192 = vadd.f32 %v1164, %v1188
        %v1193 = vadd.f32 %v1169, %v1189
        %v1194 = vadd.f32 %v1172, %v1190
        %v1195 = vmul.f32 %v1191, 0.7978846
        %v1196 = vmul.f32 %v1192, 0.7978846
        %v1197 = vmul.f32 %v1193, 0.7978846
        %v1198 = vmul.f32 %v1194, 0.7978846
        %v1199 = vtanh.pop %v1195
        %v1200 = vtanh.pop %v1196
        %v1201 = vtanh.pop %v1197
        %v1202 = vtanh.pop %v1198
        %v1203 = vadd.f32 %v1199, 1.0
        %v1204 = vadd.f32 %v1200, 1.0
        %v1205 = vadd.f32 %v1201, 1.0
        %v1206 = vadd.f32 %v1202, 1.0
        %v1207 = vmul.f32 %v1175, %v1203
        %v1208 = vmul.f32 %v1176, %v1204
        %v1209 = vmul.f32 %v1177, %v1205
        %v1210 = vmul.f32 %v1178, %v1206
        %v1211 = vpack.c.bf16 %v1208, %v1207
        %v1212 = vpack.c.bf16 %v1210, %v1209
        %v1213 = vld [vmem:[%s531] sm:$0xf]
        %v1214 = vld [vmem:[%s531 + $0x4] sm:$0xf]
        %v1215 = vld [vmem:[%s531 + $0x8] sm:$0xf]
        %v1216 = vld [vmem:[%s531 + $0xc] sm:$0xf]
        %v1217 = vld [vmem:[%s531 + $0x10] sm:$0xf]
        %v1218 = vld [vmem:[%s531 + $0x14] sm:$0xf]
        %v1219 = vld [vmem:[%s531 + $0x18] sm:$0xf]
        %v1220 = vld [vmem:[%s531 + $0x1c] sm:$0xf]
        %v1221 = vld [vmem:[%s531 + $0x20] sm:$0xf]
        %v1222 = vld [vmem:[%s531 + $0x24] sm:$0xf]
        %v1223 = vld [vmem:[%s531 + $0x28] sm:$0xf]
        %v1224 = vld [vmem:[%s531 + $0x2c] sm:$0xf]
        %v1225 = vld [vmem:[%s531 + $0x30] sm:$0xf]
        %v1226 = vld [vmem:[%s531 + $0x34] sm:$0xf]
        %v1227 = vld [vmem:[%s531 + $0x38] sm:$0xf]
        %v1228 = vld [vmem:[%s531 + $0x3c] sm:$0xf]
        %v1229 = vlaneseq
        %v1230 = vshrl.u32 %v1229, 7
        %v1231 = vsub.s32 5, %v1230
        %v1232 = vrot.slane %v686, %v1231
        %v1249 = vunpack.c.l.b16 %v1213
        %v1250 = vunpack.c.l.b16 %v1214
        %v1251 = vunpack.c.l.b16 %v1215
        %v1252 = vunpack.c.l.b16 %v1216
        %v1253 = vunpack.c.l.b16 %v1217
        %v1254 = vunpack.c.l.b16 %v1218
        %v1255 = vunpack.c.l.b16 %v1219
        %v1256 = vunpack.c.l.b16 %v1220
        %v1257 = vunpack.c.l.b16 %v1221
        %v1258 = vunpack.c.l.b16 %v1222
        %v1259 = vunpack.c.l.b16 %v1223
        %v1260 = vunpack.c.l.b16 %v1224
        %v1261 = vunpack.c.l.b16 %v1225
        %v1262 = vunpack.c.l.b16 %v1226
        %v1263 = vunpack.c.l.b16 %v1227
        %v1264 = vunpack.c.l.b16 %v1228
        %v1265 = vpack.c.b16 %v1250, %v1249
        %v1266 = vpack.c.b16 %v1252, %v1251
        %v1267 = vpack.c.b16 %v1254, %v1253
        %v1268 = vpack.c.b16 %v1256, %v1255
        %v1269 = vpack.c.b16 %v1258, %v1257
        %v1270 = vpack.c.b16 %v1260, %v1259
        %v1271 = vpack.c.b16 %v1262, %v1261
        %v1272 = vpack.c.b16 %v1264, %v1263
        %1281 = vmatprep.subr.bf16.mxu0 0
        %1282 = vmatpush1.bf16.msra.mxu0 %v1272
        %1283 = vmatprep.subr.bf16.mxu0 0
        %1284 = vmatpush1.bf16.msra.mxu0 %v1271
        %1285 = vmatprep.subr.bf16.mxu0 0
        %1286 = vmatpush1.bf16.msra.mxu0 %v1270
        %1287 = vmatprep.subr.bf16.mxu0 0
        %1288 = vmatpush1.bf16.msra.mxu0 %v1269
        %1289 = vmatprep.subr.bf16.mxu0 0
        %1290 = vmatpush1.bf16.msra.mxu0 %v1268
        %1291 = vmatprep.subr.bf16.mxu0 0
        %1292 = vmatpush1.bf16.msra.mxu0 %v1267
        %1293 = vmatprep.subr.bf16.mxu0 0
        %1294 = vmatpush1.bf16.msra.mxu0 %v1266
        %1295 = vmatprep.subr.bf16.mxu0 0
        %1296 = vmatpush1.bf16.msra.mxu0 %v1265
        %1297 = vmatprep.subr.bf16.mxu0 0
        %1298 = vmatpush2.bf16.msra.mxu0 0
        %1299 = vmatprep.subr.bf16.mxu0 0
        %1300 = vmatpush2.bf16.msra.mxu0 0
        %1301 = vmatprep.subr.bf16.mxu0 0
        %1302 = vmatpush2.bf16.msra.mxu0 0
        %1303 = vmatprep.subr.bf16.mxu0 0
        %1304 = vmatpush2.bf16.msra.mxu0 0
        %1305 = vmatprep.subr.bf16.mxu0 0
        %1306 = vmatpush2.bf16.msra.mxu0 0
        %1307 = vmatprep.subr.bf16.mxu0 0
        %1308 = vmatpush2.bf16.msra.mxu0 0
        %1309 = vmatprep.subr.bf16.mxu0 0
        %1310 = vmatpush2.bf16.msra.mxu0 0
        %1311 = vmatprep.subr.bf16.mxu0 0
        %1312 = vmatpush2.bf16.msra.mxu0 0
        %1313 = vmatprep.mubr.bf16.mxu0 0
        %1314 = vmatmul.mubr.bf16.gmra.mxu0 %v1211
        %v1315 = vpop.f32.mrf.mxu0
        %v1316 = vadd.f32 %v1232, %v1315
        %v1317 = vpop.f32.mrf.mxu0
        %v1318 = vpop.f32.mrf.mxu0
        %v1319 = vadd.f32 %v1232, %v1318
        %v1320 = vpop.f32.mrf.mxu0
        %1321 = vmatprep.mubr.bf16.mxu0 0
        %1322 = vmatmul.mubr.bf16.gmra.mxu0 %v1212
        %v1323 = vpop.f32.mrf.mxu0
        %v1324 = vadd.f32 %v1232, %v1323
        %v1325 = vpop.f32.mrf.mxu0
        %v1326 = vpop.f32.mrf.mxu0
        %v1327 = vadd.f32 %v1232, %v1326
        %v1328 = vpop.f32.mrf.mxu0
        %1329 = vdwg.mxu0
        %v1330 = vadd.f32 %v984, %v1316
        %v1331 = vadd.f32 %v985, %v1319
        %v1332 = vadd.f32 %v986, %v1324
        %v1333 = vadd.f32 %v987, %v1327
        %1334 = vst [vmem:[#allocation2] sm:$0xff] %v1330
        %1335 = vst [vmem:[#allocation2 + $0x8] sm:$0xff] %v1331
        %1336 = vst [vmem:[#allocation2 + $0x10] sm:$0xff] %v1332
        %1337 = vst [vmem:[#allocation2 + $0x18] sm:$0xff] %v1333
        %p1338 = scmp.eq.s32.totalorder %s27, 1
        // Predicated region
        $region85: #{mlp_mixer_forward.1} parent=71 // pred_check
          %p1339 = pneg %p1338
        $region86: #{mlp_mixer_forward.1} parent=71 // pred_check_branch
          %1341 = sbr.rel (%p1339) target = $region88
        $region87: #{mlp_mixer_forward.1} parent=71 // pred_region
          %v1342 = vld [vmem:[%s8] sm:$0x1]
          %v1343 = vld [vmem:[%s9] sm:$0x1]
          %1344 = vadd.xlane.f32.xlu0 %v1330
          %v1345 = vpop.xlane.xlu0 %1344
          %1346 = vadd.xlane.f32.xlu0 %v1331
          %v1347 = vpop.xlane.xlu0 %1346
          %1348 = vadd.xlane.f32.xlu0 %v1332
          %v1349 = vpop.xlane.xlu0 %1348
          %1350 = vadd.xlane.f32.xlu0 %v1333
          %v1351 = vpop.xlane.xlu0 %1350
          %v1352 = vmul.f32 %v1345, 0.03125
          %v1353 = vmul.f32 %v1347, 0.03125
          %v1354 = vmul.f32 %v1349, 0.03125
          %v1355 = vmul.f32 %v1351, 0.03125
          %v1356 = vmul.f32 %v1330, %v1330
          %v1357 = vmul.f32 %v1331, %v1331
          %v1358 = vmul.f32 %v1332, %v1332
          %v1359 = vmul.f32 %v1333, %v1333
          %1360 = vadd.xlane.f32.xlu0 %v1356
          %v1361 = vpop.xlane.xlu0 %1360
          %1362 = vadd.xlane.f32.xlu0 %v1357
          %v1363 = vpop.xlane.xlu0 %1362
          %1364 = vadd.xlane.f32.xlu0 %v1358
          %v1365 = vpop.xlane.xlu0 %1364
          %1366 = vadd.xlane.f32.xlu0 %v1359
          %v1367 = vpop.xlane.xlu0 %1366
          %v1368 = vmul.f32 %v1361, 0.03125
          %v1369 = vmul.f32 %v1363, 0.03125
          %v1370 = vmul.f32 %v1365, 0.03125
          %v1371 = vmul.f32 %v1367, 0.03125
          %v1372 = vmul.f32 %v1352, %v1352
          %v1373 = vmul.f32 %v1353, %v1353
          %v1374 = vmul.f32 %v1354, %v1354
          %v1375 = vmul.f32 %v1355, %v1355
          %v1376 = vsub.f32 %v1368, %v1372
          %v1377 = vsub.f32 %v1369, %v1373
          %v1378 = vsub.f32 %v1370, %v1374
          %v1379 = vsub.f32 %v1371, %v1375
          %v1380 = vsub.f32 %v1330, %v1352
          %v1381 = vsub.f32 %v1331, %v1353
          %v1382 = vsub.f32 %v1332, %v1354
          %v1383 = vsub.f32 %v1333, %v1355
          %v1384 = vadd.f32 %v1376, 1e-05
          %v1385 = vadd.f32 %v1377, 1e-05
          %v1386 = vadd.f32 %v1378, 1e-05
          %v1387 = vadd.f32 %v1379, 1e-05
          %v1388 = vrsqrt.pop %v1384
          %v1389 = vrsqrt.pop %v1385
          %v1390 = vrsqrt.pop %v1386
          %v1391 = vrsqrt.pop %v1387
          %v1393 = vlaneseq
          %v1394 = vshrl.u32 %v1393, 7
          %v1395 = vsub.s32 0, %v1394
          %v1396 = vrot.slane %v1342, %v1395
          %v1398 = vmul.f32 %v1388, %v1396
          %v1399 = vmul.f32 %v1389, %v1396
          %v1400 = vmul.f32 %v1390, %v1396
          %v1401 = vmul.f32 %v1391, %v1396
          %v1402 = vmul.f32 %v1380, %v1398
          %v1403 = vmul.f32 %v1381, %v1399
          %v1404 = vmul.f32 %v1382, %v1400
          %v1405 = vmul.f32 %v1383, %v1401
          %v1407 = vlaneseq
          %v1408 = vshrl.u32 %v1407, 7
          %v1409 = vsub.s32 0, %v1408
          %v1410 = vrot.slane %v1343, %v1409
          %v1412 = vadd.f32 %v1402, %v1410
          %v1413 = vadd.f32 %v1403, %v1410
          %v1414 = vadd.f32 %v1404, %v1410
          %v1415 = vadd.f32 %v1405, %v1410
          %v1416 = vld [vmem:[%s12] sm:$0x1]
          %v1418 = vsel %vm768, %v1416, 0
          %1420 = vmatprep.subr.mxu0 0.0
          %1421 = vmatpush1.msra.mxu0 0.0
          %1422 = vmatprep.subr.mxu0 0.0
          %1423 = vmatpush1.msra.mxu0 0.0
          %1424 = vmatprep.subr.mxu0 0.0
          %1425 = vmatpush1.msra.mxu0 0.0
          %1426 = vmatprep.subr.mxu0 0.0
          %1427 = vmatpush1.msra.mxu0 0.0
          %1428 = vmatprep.subr.mxu0 0.0
          %1429 = vmatpush1.msra.mxu0 0.0
          %1430 = vmatprep.subr.mxu0 0.0
          %1431 = vmatpush1.msra.mxu0 0.0
          %1432 = vmatprep.subr.mxu0 0.0
          %1433 = vmatpush1.msra.mxu0 0.0
          %1434 = vmatprep.subr.mxu0 0.0
          %1435 = vmatpush1.msra.mxu0 0.0
          %1436 = vmatprep.subr.mxu0 0.0
          %1437 = vmatpush1.msra.mxu0 0.0
          %1438 = vmatprep.subr.mxu0 0.0
          %1439 = vmatpush1.msra.mxu0 0.0
          %1440 = vmatprep.subr.mxu0 0.0
          %1441 = vmatpush1.msra.mxu0 0.0
          %1442 = vmatprep.subr.mxu0 0.0
          %1443 = vmatpush1.msra.mxu0 0.0
          %1444 = vmatprep.subr.mxu0 0.0
          %1445 = vmatpush1.msra.mxu0 0.0
          %1446 = vmatprep.subr.mxu0 0.0
          %1447 = vmatpush1.msra.mxu0 0.0
          %1448 = vmatprep.subr.mxu0 0.0
          %1449 = vmatpush1.msra.mxu0 %v1413
          %1450 = vmatprep.subr.mxu0 0.0
          %1451 = vmatpush1.msra.mxu0 %v1412
          %1452 = vmatprep.subr.mxu0 0.0
          %1453 = vmatpush2.msra.mxu0 0.0
          %1454 = vmatprep.subr.mxu0 0.0
          %1455 = vmatpush2.msra.mxu0 0.0
          %1456 = vmatprep.subr.mxu0 0.0
          %1457 = vmatpush2.msra.mxu0 0.0
          %1458 = vmatprep.subr.mxu0 0.0
          %1459 = vmatpush2.msra.mxu0 0.0
          %1460 = vmatprep.subr.mxu0 0.0
          %1461 = vmatpush2.msra.mxu0 0.0
          %1462 = vmatprep.subr.mxu0 0.0
          %1463 = vmatpush2.msra.mxu0 0.0
          %1464 = vmatprep.subr.mxu0 0.0
          %1465 = vmatpush2.msra.mxu0 0.0
          %1466 = vmatprep.subr.mxu0 0.0
          %1467 = vmatpush2.msra.mxu0 0.0
          %1468 = vmatprep.subr.mxu0 0.0
          %1469 = vmatpush2.msra.mxu0 0.0
          %1470 = vmatprep.subr.mxu0 0.0
          %1471 = vmatpush2.msra.mxu0 0.0
          %1472 = vmatprep.subr.mxu0 0.0
          %1473 = vmatpush2.msra.mxu0 0.0
          %1474 = vmatprep.subr.mxu0 0.0
          %1475 = vmatpush2.msra.mxu0 0.0
          %1476 = vmatprep.subr.mxu0 0.0
          %1477 = vmatpush2.msra.mxu0 0.0
          %1478 = vmatprep.subr.mxu0 0.0
          %1479 = vmatpush2.msra.mxu0 0.0
          %1480 = vmatprep.subr.mxu0 0.0
          %1481 = vmatpush2.msra.mxu0 0.0
          %1482 = vmatprep.subr.mxu0 0.0
          %1483 = vmatpush2.msra.mxu0 0.0
          %1484 = vmatprep.mubr.f32.mxu0 0.0
          %1485 = vmatmul.mubr.f32.gmra.mxu0 %v1418
          %v1486 = vpop.f32.mrf.mxu0
          %v1487 = vadd.f32 0.0, %v1486
          %v1488 = vpop.f32.mrf.mxu0
          %1489 = vdwg.mxu0
          %1490 = vmatprep.subr.mxu0 0.0
          %1491 = vmatpush1.msra.mxu0 0.0
          %1492 = vmatprep.subr.mxu0 0.0
          %1493 = vmatpush1.msra.mxu0 0.0
          %1494 = vmatprep.subr.mxu0 0.0
          %1495 = vmatpush1.msra.mxu0 0.0
          %1496 = vmatprep.subr.mxu0 0.0
          %1497 = vmatpush1.msra.mxu0 0.0
          %1498 = vmatprep.subr.mxu0 0.0
          %1499 = vmatpush1.msra.mxu0 0.0
          %1500 = vmatprep.subr.mxu0 0.0
          %1501 = vmatpush1.msra.mxu0 0.0
          %1502 = vmatprep.subr.mxu0 0.0
          %1503 = vmatpush1.msra.mxu0 0.0
          %1504 = vmatprep.subr.mxu0 0.0
          %1505 = vmatpush1.msra.mxu0 0.0
          %1506 = vmatprep.subr.mxu0 0.0
          %1507 = vmatpush1.msra.mxu0 0.0
          %1508 = vmatprep.subr.mxu0 0.0
          %1509 = vmatpush1.msra.mxu0 0.0
          %1510 = vmatprep.subr.mxu0 0.0
          %1511 = vmatpush1.msra.mxu0 0.0
          %1512 = vmatprep.subr.mxu0 0.0
          %1513 = vmatpush1.msra.mxu0 0.0
          %1514 = vmatprep.subr.mxu0 0.0
          %1515 = vmatpush1.msra.mxu0 0.0
          %1516 = vmatprep.subr.mxu0 0.0
          %1517 = vmatpush1.msra.mxu0 0.0
          %1518 = vmatprep.subr.mxu0 0.0
          %1519 = vmatpush1.msra.mxu0 %v1415
          %1520 = vmatprep.subr.mxu0 0.0
          %1521 = vmatpush1.msra.mxu0 %v1414
          %1522 = vmatprep.subr.mxu0 0.0
          %1523 = vmatpush2.msra.mxu0 0.0
          %1524 = vmatprep.subr.mxu0 0.0
          %1525 = vmatpush2.msra.mxu0 0.0
          %1526 = vmatprep.subr.mxu0 0.0
          %1527 = vmatpush2.msra.mxu0 0.0
          %1528 = vmatprep.subr.mxu0 0.0
          %1529 = vmatpush2.msra.mxu0 0.0
          %1530 = vmatprep.subr.mxu0 0.0
          %1531 = vmatpush2.msra.mxu0 0.0
          %1532 = vmatprep.subr.mxu0 0.0
          %1533 = vmatpush2.msra.mxu0 0.0
          %1534 = vmatprep.subr.mxu0 0.0
          %1535 = vmatpush2.msra.mxu0 0.0
          %1536 = vmatprep.subr.mxu0 0.0
          %1537 = vmatpush2.msra.mxu0 0.0
          %1538 = vmatprep.subr.mxu0 0.0
          %1539 = vmatpush2.msra.mxu0 0.0
          %1540 = vmatprep.subr.mxu0 0.0
          %1541 = vmatpush2.msra.mxu0 0.0
          %1542 = vmatprep.subr.mxu0 0.0
          %1543 = vmatpush2.msra.mxu0 0.0
          %1544 = vmatprep.subr.mxu0 0.0
          %1545 = vmatpush2.msra.mxu0 0.0
          %1546 = vmatprep.subr.mxu0 0.0
          %1547 = vmatpush2.msra.mxu0 0.0
          %1548 = vmatprep.subr.mxu0 0.0
          %1549 = vmatpush2.msra.mxu0 0.0
          %1550 = vmatprep.subr.mxu0 0.0
          %1551 = vmatpush2.msra.mxu0 0.0
          %1552 = vmatprep.subr.mxu0 0.0
          %1553 = vmatpush2.msra.mxu0 0.0
          %1554 = vmatprep.mubr.f32.mxu0 0.0
          %1555 = vmatmul.mubr.f32.gmra.mxu0 %v1418
          %v1556 = vpop.f32.mrf.mxu0
          %v1557 = vadd.f32 0.0, %v1556
          %v1558 = vpop.f32.mrf.mxu0
          %1559 = vdwg.mxu0
          %v1560 = vpack.c.bf16 %v1487, %v1487
          %v1561 = vpack.c.bf16 %v1557, %v1557
          %v1562 = vld [vmem:[#allocation6] sm:$0xf]
          %v1563 = vld [vmem:[#allocation6 + $0x4] sm:$0xf]
          %v1564 = vld [vmem:[#allocation6 + $0x8] sm:$0xf]
          %v1565 = vld [vmem:[#allocation6 + $0xc] sm:$0xf]
          %v1566 = vld [vmem:[#allocation6 + $0x10] sm:$0xf]
          %v1567 = vld [vmem:[#allocation6 + $0x14] sm:$0xf]
          %v1568 = vld [vmem:[#allocation6 + $0x18] sm:$0xf]
          %v1569 = vld [vmem:[#allocation6 + $0x1c] sm:$0xf]
          %v1570 = vld [vmem:[#allocation6 + $0x20] sm:$0xf]
          %v1571 = vld [vmem:[#allocation6 + $0x24] sm:$0xf]
          %v1572 = vld [vmem:[#allocation6 + $0x28] sm:$0xf]
          %v1573 = vld [vmem:[#allocation6 + $0x2c] sm:$0xf]
          %v1574 = vld [vmem:[#allocation6 + $0x30] sm:$0xf]
          %v1575 = vld [vmem:[#allocation6 + $0x34] sm:$0xf]
          %v1576 = vld [vmem:[#allocation6 + $0x38] sm:$0xf]
          %v1577 = vld [vmem:[#allocation6 + $0x3c] sm:$0xf]
          %v1578 = vld [vmem:[%s11] sm:$0x1]
          %v1580 = vlaneseq
          %v1581 = vshrl.u32 %v1580, 7
          %v1582 = vsub.s32 0, %v1581
          %v1583 = vrot.slane %v1578, %v1582
          %v1587 = vunpack.c.l.b16 %v1560
          %v1588 = vunpack.c.l.b16 %v1561
          %v1589 = vrot.slane %v1588, 7
          %vm1590 = vcmask 1041409
          %v1591 = vsel %vm1590, %v1589, %v1587
          %v1592 = vpack.c.b16 %v1591, %v1591
          %v1610 = vunpack.c.l.b16 %v1562
          %v1611 = vunpack.c.l.b16 %v1563
          %v1612 = vunpack.c.l.b16 %v1564
          %v1613 = vunpack.c.l.b16 %v1565
          %v1614 = vunpack.c.l.b16 %v1566
          %v1615 = vunpack.c.l.b16 %v1567
          %v1616 = vunpack.c.l.b16 %v1568
          %v1617 = vunpack.c.l.b16 %v1569
          %v1618 = vunpack.c.l.b16 %v1570
          %v1619 = vunpack.c.l.b16 %v1571
          %v1620 = vunpack.c.l.b16 %v1572
          %v1621 = vunpack.c.l.b16 %v1573
          %v1622 = vunpack.c.l.b16 %v1574
          %v1623 = vunpack.c.l.b16 %v1575
          %v1624 = vunpack.c.l.b16 %v1576
          %v1625 = vunpack.c.l.b16 %v1577
          %v1626 = vpack.c.b16 %v1611, %v1610
          %v1627 = vpack.c.b16 %v1613, %v1612
          %v1628 = vpack.c.b16 %v1615, %v1614
          %v1629 = vpack.c.b16 %v1617, %v1616
          %v1630 = vpack.c.b16 %v1619, %v1618
          %v1631 = vpack.c.b16 %v1621, %v1620
          %v1632 = vpack.c.b16 %v1623, %v1622
          %v1633 = vpack.c.b16 %v1625, %v1624
          %1642 = vmatprep.subr.bf16.mxu0 0
          %1643 = vmatpush1.bf16.msra.mxu0 %v1633
          %1644 = vmatprep.subr.bf16.mxu0 0
          %1645 = vmatpush1.bf16.msra.mxu0 %v1632
          %1646 = vmatprep.subr.bf16.mxu0 0
          %1647 = vmatpush1.bf16.msra.mxu0 %v1631
          %1648 = vmatprep.subr.bf16.mxu0 0
          %1649 = vmatpush1.bf16.msra.mxu0 %v1630
          %1650 = vmatprep.subr.bf16.mxu0 0
          %1651 = vmatpush1.bf16.msra.mxu0 %v1629
          %1652 = vmatprep.subr.bf16.mxu0 0
          %1653 = vmatpush1.bf16.msra.mxu0 %v1628
          %1654 = vmatprep.subr.bf16.mxu0 0
          %1655 = vmatpush1.bf16.msra.mxu0 %v1627
          %1656 = vmatprep.subr.bf16.mxu0 0
          %1657 = vmatpush1.bf16.msra.mxu0 %v1626
          %1658 = vmatprep.subr.bf16.mxu0 0
          %1659 = vmatpush2.bf16.msra.mxu0 0
          %1660 = vmatprep.subr.bf16.mxu0 0
          %1661 = vmatpush2.bf16.msra.mxu0 0
          %1662 = vmatprep.subr.bf16.mxu0 0
          %1663 = vmatpush2.bf16.msra.mxu0 0
          %1664 = vmatprep.subr.bf16.mxu0 0
          %1665 = vmatpush2.bf16.msra.mxu0 0
          %1666 = vmatprep.subr.bf16.mxu0 0
          %1667 = vmatpush2.bf16.msra.mxu0 0
          %1668 = vmatprep.subr.bf16.mxu0 0
          %1669 = vmatpush2.bf16.msra.mxu0 0
          %1670 = vmatprep.subr.bf16.mxu0 0
          %1671 = vmatpush2.bf16.msra.mxu0 0
          %1672 = vmatprep.subr.bf16.mxu0 0
          %1673 = vmatpush2.bf16.msra.mxu0 0
          %1674 = vmatprep.mubr.bf16.mxu0 0
          %1675 = vmatmul.mubr.bf16.gmra.mxu0 %v1592
          %v1676 = vpop.f32.mrf.mxu0
          %v1677 = vadd.f32 %v1583, %v1676
          %v1678 = vpop.f32.mrf.mxu0
          %v1679 = vpop.f32.mrf.mxu0
          %v1680 = vpop.f32.mrf.mxu0
          %1681 = vdwg.mxu0
          %1682 = vst [vmem:[#allocation8] sm:$0x3] %v1677
        $region88: #{mlp_mixer_forward.1} parent=71 // pred_fallthru
          _
        // Predicated region
        $region89: #{mlp_mixer_forward.1} parent=71 // pred_check
          %p1683 = pneg %p338
        $region90: #{mlp_mixer_forward.1} parent=71 // pred_check_branch
          %1685 = sbr.rel (%p1683) target = $region92
        $region91: #{mlp_mixer_forward.1} parent=71 // pred_region
          %s1687 = ssub.s32 32, 32
          %1688 = vsyncadd [#allocation5], %s1687
          %s1690 = sshll.u32 [#allocation8], 4
          %s1691 = int_to_ptr.vmem [resolvable:$true] %s1690
          %1693 = dma.vmem_to_hbm [thread:$0]  %s1691, 32, %s13, [#allocation5]
        $region92: #{mlp_mixer_forward.1} parent=71 // pred_fallthru
          _
        // Predicated region
        $region93: #{mlp_mixer_forward.1} parent=71 // pred_check
          %p1694 = pneg %p338
        $region94: #{mlp_mixer_forward.1} parent=71 // pred_check_branch
          %1696 = sbr.rel (%p1694) target = $region96
        $region95: #{mlp_mixer_forward.1} parent=71 // pred_region
          %1697 = dma.done [#allocation5], 32
        $region96: #{mlp_mixer_forward.1} parent=71 // pred_fallthru
          _
      $region72: #{mlp_mixer_forward.1} parent=5 // pred_fallthru
        _
      %p1698 = scmp.le.s32.totalorder 2, %s22
      // Predicated region
      $region97: #{mlp_mixer_forward.1} parent=5 // pred_check
        %p1699 = pneg %p1698
      $region98: #{mlp_mixer_forward.1} parent=5 // pred_check_branch
        %1701 = sbr.rel (%p1699) target = $region100
      $region99: #{mlp_mixer_forward.1} parent=5 // pred_region
        %s1702 = ssub.s32 %s22, 2
      $region100: #{mlp_mixer_forward.1} parent=5 // pred_fallthru
        _
    $region6: #{mlp_mixer_forward.1} parent=1 // loop_footer
      %s26 = sadd.s32 1, %s22
    $region7: #{mlp_mixer_forward.1} parent=1 // loop_footer_branch
      %21 = sbr.rel target = $region3
    $region8: #{mlp_mixer_forward.1} parent=1 // loop_exit
      _
    %1703 = vsyncpa [#allocation4], 1
    %s1704 = scalar_lea.sflag [#allocation4], 1
    %1705 = vsyncpa %s1704, 1
    %1706 = vsyncpa [#allocation7], 1
    %1707 = vsyncpa [#allocation5], 1
    %s1708 = scalar_lea.sflag [#allocation5], 1
    %1709 = vsyncpa %s1708, 1

</llo_original>
